<compile_context>
chip_gen: v7x
topology: tpu7x:2x2x1
jax: 0.10.0
libtpu: 0.0.40
codegen_flags: <defaults>
</compile_context>

<pallas_src>
import math

import jax
import jax.numpy as jnp
from jax import lax
from jax.experimental import pallas as pl
from jax.experimental.pallas import tpu as pltpu

# ---------------------------------------------------------------------------
# Module configuration (mirrors the Downsampling constructor arguments).
# ---------------------------------------------------------------------------
IN_CHANNELS = 4
OUT_CHANNELS = 32            # == PRM embed_dim
DILATIONS = (1, 2)
DOWNSAMPLE_RATIO = 4         # PRM conv stride; PCM downsamples by the same total factor (2 * 2)
KSIZE = 3
BN_EPS = 1e-5

# PCM strides: residual = downsample_ratio // 2; stride = (residual > 0) + 1 for both convs.
_PCM_STRIDE = int(DOWNSAMPLE_RATIO // 2 > 0) + 1

_SQRT_2_OVER_PI = 0.7978845608028654


def _gelu_tanh(x):
    # tanh-approximate GELU (EUP tanh lowers cleanly on TPU).
    return 0.5 * x * (1.0 + jnp.tanh(_SQRT_2_OVER_PI * (x + 0.044715 * x * x * x)))


def _silu(x):
    return x * (1.0 / (1.0 + jnp.exp(-x)))


# ---------------------------------------------------------------------------
# im2col (layout-only, done in the wrapper; feature order = (cin, kh, kw) to
# match torch's Conv2d weight.reshape(out, cin*kh*kw)).
# ---------------------------------------------------------------------------
def _im2col(x, ksize, stride, padding, dilation):
    b, c, h, w = x.shape
    xp = jnp.pad(x, ((0, 0), (0, 0), (padding, padding), (padding, padding)))
    ho = (h + 2 * padding - dilation * (ksize - 1) - 1) // stride + 1
    wo = (w + 2 * padding - dilation * (ksize - 1) - 1) // stride + 1
    cols = []
    for kh in range(ksize):
        for kw in range(ksize):
            sl = xp[:, :,
                    kh * dilation: kh * dilation + (ho - 1) * stride + 1: stride,
                    kw * dilation: kw * dilation + (wo - 1) * stride + 1: stride]
            cols.append(sl)                                  # [b, c, ho, wo]
    patches = jnp.stack(cols, axis=2)                        # [b, c, k*k, ho, wo]
    patches = patches.transpose(0, 3, 4, 1, 2)               # [b, ho, wo, c, k*k]
    return patches.reshape(b * ho * wo, c * ksize * ksize), ho, wo


# ---------------------------------------------------------------------------
# Kernel 1: fused PRM (all dilated convs + GELU, concatenated dilation-major)
#           and the linsk projection.  Grid = (row_tiles, num_dilations).
# ---------------------------------------------------------------------------
def _prm_linsk_kernel(patches_ref, wc_ref, bc_ref, wl_ref, y_ref):
    j = pl.program_id(1)                       # dilation index (inner reduction axis)

    @pl.when(j == 0)
    def _():
        y_ref[...] = jnp.zeros_like(y_ref)

    h = jnp.dot(patches_ref[...], wc_ref[...], preferred_element_type=jnp.float32)
    h = h + bc_ref[...]
    g = _gelu_tanh(h)
    y_ref[...] += jnp.dot(g, wl_ref[...], preferred_element_type=jnp.float32)


def _prm_linsk(patches, wc, bc, wl, *, tm=256):
    n, m, kp = patches.shape
    e = wc.shape[2]
    out = wl.shape[2]
    tm = m if tm >= m else max(8, (tm // 8) * 8)     # 8-aligned row tile when tiling
    grid = (pl.cdiv(m, tm), n)
    return pl.pallas_call(
        _prm_linsk_kernel,
        out_shape=jax.ShapeDtypeStruct((m, out), jnp.float32),
        grid_spec=pltpu.PrefetchScalarGridSpec(
            num_scalar_prefetch=0,
            grid=grid,
            in_specs=[
                pl.BlockSpec((None, tm, kp), lambda i, j: (j, i, 0)),
                pl.BlockSpec((None, kp, e), lambda i, j: (j, 0, 0)),
                pl.BlockSpec((None, 1, e), lambda i, j: (j, 0, 0)),
                pl.BlockSpec((None, e, out), lambda i, j: (j, 0, 0)),
            ],
            out_specs=pl.BlockSpec((tm, out), lambda i, j: (i, 0)),
        ),
        compiler_params=pltpu.CompilerParams(
            dimension_semantics=("parallel", "arbitrary")),
    )(patches, wc, bc, wl)


# ---------------------------------------------------------------------------
# Kernel 2: first PCM conv (as patches @ W + b) + SiLU.
# ---------------------------------------------------------------------------
def _conv_silu_kernel(p_ref, w_ref, b_ref, o_ref):
    h = jnp.dot(p_ref[...], w_ref[...], preferred_element_type=jnp.float32) + b_ref[...]
    o_ref[...] = _silu(h)


def _conv_silu(patches, w, b, *, tm=256):
    m, kin = patches.shape
    out = w.shape[1]
    tm = m if tm >= m else max(8, (tm // 8) * 8)
    grid = (pl.cdiv(m, tm),)
    return pl.pallas_call(
        _conv_silu_kernel,
        out_shape=jax.ShapeDtypeStruct((m, out), jnp.float32),
        grid_spec=pltpu.PrefetchScalarGridSpec(
            num_scalar_prefetch=0,
            grid=grid,
            in_specs=[
                pl.BlockSpec((tm, kin), lambda i: (i, 0)),
                pl.BlockSpec((kin, out), lambda i: (0, 0)),
                pl.BlockSpec((1, out), lambda i: (0, 0)),
            ],
            out_specs=pl.BlockSpec((tm, out), lambda i: (i, 0)),
        ),
        compiler_params=pltpu.CompilerParams(dimension_semantics=("parallel",)),
    )(patches, w, b)


# ---------------------------------------------------------------------------
# Kernel 3: second PCM conv + inference BatchNorm + SiLU, fused with the final
#           res_scale1 * y + layer_scale2 * op combine.
# ---------------------------------------------------------------------------
def _conv_bn_silu_combine_kernel(p_ref, w_ref, b_ref, bns_ref, bnb_ref,
                                 y_ref, rs_ref, ls_ref, o_ref):
    h = jnp.dot(p_ref[...], w_ref[...], preferred_element_type=jnp.float32) + b_ref[...]
    h = h * bns_ref[...] + bnb_ref[...]          # BatchNorm2d (inference mode)
    op = _silu(h)
    o_ref[...] = y_ref[...] * rs_ref[...] + op * ls_ref[...]


def _conv_bn_silu_combine(patches, w, b, bn_scale, bn_shift, y, res_scale, layer_scale, *, tm=256):
    m, kin = patches.shape
    out = w.shape[1]
    tm = m if tm >= m else max(8, (tm // 8) * 8)
    grid = (pl.cdiv(m, tm),)
    vec = lambda i: (0, 0)
    return pl.pallas_call(
        _conv_bn_silu_combine_kernel,
        out_shape=jax.ShapeDtypeStruct((m, out), jnp.float32),
        grid_spec=pltpu.PrefetchScalarGridSpec(
            num_scalar_prefetch=0,
            grid=grid,
            in_specs=[
                pl.BlockSpec((tm, kin), lambda i: (i, 0)),
                pl.BlockSpec((kin, out), vec),
                pl.BlockSpec((1, out), vec),
                pl.BlockSpec((1, out), vec),
                pl.BlockSpec((1, out), vec),
                pl.BlockSpec((tm, out), lambda i: (i, 0)),
                pl.BlockSpec((1, out), vec),
                pl.BlockSpec((1, out), vec),
            ],
            out_specs=pl.BlockSpec((tm, out), lambda i: (i, 0)),
        ),
        compiler_params=pltpu.CompilerParams(dimension_semantics=("parallel",)),
    )(patches, w, b, bn_scale, bn_shift, y, res_scale, layer_scale)


# ---------------------------------------------------------------------------
# Full forward (Pallas path).
# ---------------------------------------------------------------------------
def downsampling_forward(x, params):
    """Downsampling.forward for square inputs (H == W branch), NCHW input -> NHWC output."""
    b, cin, h, w = x.shape
    assert h == w, "only the square-input (flag) branch is implemented"

    # --- PRM (self.sk): dilated 3x3 stride-DOWNSAMPLE_RATIO convs + GELU, concat + linsk ---
    patch_list = []
    ho = wo = None
    for d in DILATIONS:
        pad = math.ceil(((KSIZE - 1) * d + 1 - DOWNSAMPLE_RATIO) / 2)
        pt, ho_d, wo_d = _im2col(x, KSIZE, DOWNSAMPLE_RATIO, pad, d)
        if ho is None:
            ho, wo = ho_d, wo_d
        assert (ho_d, wo_d) == (ho, wo)
        patch_list.append(pt)
    patches = jnp.stack(patch_list, axis=0)                   # [N_dil, B*ho*wo, cin*9]

    y = _prm_linsk(patches, params["wc"], params["bc"], params["wl"])   # [B*ho*wo, OUT]

    # --- PCM: conv3x3 s2 + SiLU, conv3x3 s2 + BN(eval) + SiLU ---
    p1, h1, w1 = _im2col(x, KSIZE, _PCM_STRIDE, 1, 1)
    o1 = _conv_silu(p1, params["w1"], params["b1"])                     # [B*h1*w1, OUT]
    o1_nchw = o1.reshape(b, h1, w1, OUT_CHANNELS).transpose(0, 3, 1, 2)
    p2, h2, w2 = _im2col(o1_nchw, KSIZE, _PCM_STRIDE, 1, 1)
    assert (h2, w2) == (ho, wo)

    bn_scale = params["bn_gamma"] / jnp.sqrt(params["bn_var"] + BN_EPS)
    bn_shift = params["bn_beta"] - params["bn_mean"] * bn_scale

    out = _conv_bn_silu_combine(
        p2, params["w2"], params["b2"],
        bn_scale.reshape(1, -1), bn_shift.reshape(1, -1),
        y,
        params["res_scale1"].reshape(1, -1),
        params["layer_scale2"].reshape(1, -1))
    return out.reshape(b, ho, wo, OUT_CHANNELS)


# ---------------------------------------------------------------------------
# Pure-JAX reference (mirrors the torch forward with lax.conv_general_dilated).
# ---------------------------------------------------------------------------
def downsampling_ref(x, params):
    n = len(DILATIONS)
    e = OUT_CHANNELS
    feats = []
    for i, d in enumerate(DILATIONS):
        pad = math.ceil(((KSIZE - 1) * d + 1 - DOWNSAMPLE_RATIO) / 2)
        wconv = params["wc"][i].T.reshape(e, IN_CHANNELS, KSIZE, KSIZE)
        hc = lax.conv_general_dilated(
            x, wconv, (DOWNSAMPLE_RATIO, DOWNSAMPLE_RATIO),
            [(pad, pad), (pad, pad)], rhs_dilation=(d, d),
            dimension_numbers=("NCHW", "OIHW", "NCHW"),
            precision=lax.Precision.HIGHEST)
        hc = hc + params["bc"][i, 0][None, :, None, None]
        feats.append(_gelu_tanh(hc))
    ycat = jnp.stack(feats, axis=-1)                 # [B, E, ho, wo, N]
    ycat = ycat.transpose(0, 2, 3, 4, 1)             # [B, ho, wo, N, E]  (dilation-major)
    b_, ho, wo = ycat.shape[:3]
    sk = ycat.reshape(b_, ho, wo, n * e)
    wl_flat = params["wl"].reshape(n * e, OUT_CHANNELS)
    y = jnp.einsum("bhwf,fo->bhwo", sk, wl_flat, precision=lax.Precision.HIGHEST)

    w1conv = params["w1"].T.reshape(OUT_CHANNELS, IN_CHANNELS, KSIZE, KSIZE)
    op = lax.conv_general_dilated(x, w1conv, (_PCM_STRIDE, _PCM_STRIDE), [(1, 1), (1, 1)],
                                  dimension_numbers=("NCHW", "OIHW", "NCHW"),
                                  precision=lax.Precision.HIGHEST)
    op = _silu(op + params["b1"][0][None, :, None, None])
    w2conv = params["w2"].T.reshape(OUT_CHANNELS, OUT_CHANNELS, KSIZE, KSIZE)
    op = lax.conv_general_dilated(op, w2conv, (_PCM_STRIDE, _PCM_STRIDE), [(1, 1), (1, 1)],
                                  dimension_numbers=("NCHW", "OIHW", "NCHW"),
                                  precision=lax.Precision.HIGHEST)
    op = op + params["b2"][0][None, :, None, None]
    op = (op - params["bn_mean"][None, :, None, None]) / jnp.sqrt(
        params["bn_var"][None, :, None, None] + BN_EPS)
    op = op * params["bn_gamma"][None, :, None, None] + params["bn_beta"][None, :, None, None]
    op = _silu(op).transpose(0, 2, 3, 1)             # NHWC

    return y * params["res_scale1"] + op * params["layer_scale2"]


# ---------------------------------------------------------------------------
# Parameter construction (deterministic).
# ---------------------------------------------------------------------------
def make_params(key):
    n = len(DILATIONS)
    e = OUT_CHANNELS
    kp = IN_CHANNELS * KSIZE * KSIZE
    k2 = OUT_CHANNELS * KSIZE * KSIZE
    ks = jax.random.split(key, 13)
    p = {}
    p["wc"] = jax.random.normal(ks[0], (n, kp, e), jnp.float32) / math.sqrt(kp)
    p["bc"] = 0.1 * jax.random.normal(ks[1], (n, 1, e), jnp.float32)
    p["wl"] = jax.random.normal(ks[2], (n, e, OUT_CHANNELS), jnp.float32) / math.sqrt(n * e)
    p["w1"] = jax.random.normal(ks[3], (kp, OUT_CHANNELS), jnp.float32) / math.sqrt(kp)
    p["b1"] = 0.1 * jax.random.normal(ks[4], (1, OUT_CHANNELS), jnp.float32)
    p["w2"] = jax.random.normal(ks[5], (k2, OUT_CHANNELS), jnp.float32) / math.sqrt(k2)
    p["b2"] = 0.1 * jax.random.normal(ks[6], (1, OUT_CHANNELS), jnp.float32)
    p["bn_gamma"] = 1.0 + 0.1 * jax.random.normal(ks[7], (OUT_CHANNELS,), jnp.float32)
    p["bn_beta"] = 0.1 * jax.random.normal(ks[8], (OUT_CHANNELS,), jnp.float32)
    p["bn_mean"] = 0.1 * jax.random.normal(ks[9], (OUT_CHANNELS,), jnp.float32)
    p["bn_var"] = jax.random.uniform(ks[10], (OUT_CHANNELS,), jnp.float32, minval=0.5, maxval=1.5)
    p["res_scale1"] = 1.0 + 0.1 * jax.random.normal(ks[11], (OUT_CHANNELS,), jnp.float32)
    p["layer_scale2"] = 1.0 + 0.1 * jax.random.normal(ks[12], (OUT_CHANNELS,), jnp.float32)
    return p


if __name__ == "__main__":
    key = jax.random.PRNGKey(0)
    kx, kparams = jax.random.split(key)

    # Square input -> the `flag` branch of Downsampling.forward.
    x = jax.random.normal(kx, (2, IN_CHANNELS, 16, 16), jnp.float32)
    params = make_params(kparams)

    fwd = jax.jit(downsampling_forward)
    out = jax.block_until_ready(fwd(x, params))

    ref = downsampling_ref(x, params)
    assert out.shape == (2, 4, 4, OUT_CHANNELS), out.shape
    assert ref.shape == out.shape
    max_err = float(jnp.max(jnp.abs(out - ref)))
    assert jnp.allclose(out, ref, atol=2e-3, rtol=2e-3), f"mismatch vs reference, max err {max_err}"

    print("KERNEL_OK")
</pallas_src>

<mosaic_0001>
module attributes {stable_mosaic.version = 11 : i64} {
  func.func @_conv_silu_kernel(%arg0: i32, %arg1: memref<128x36xf32, #tpu.memory_space<vmem>>, %arg2: memref<36x32xf32, #tpu.memory_space<vmem>>, %arg3: memref<1x32xf32, #tpu.memory_space<vmem>>, %arg4: memref<128x32xf32, #tpu.memory_space<vmem>>) attributes {dimension_semantics = [#tpu.dimension_semantics<parallel>], iteration_bounds = array<i64: 1>, scalar_prefetch = 0 : i64, scratch_operands = 0 : i64, tpu.core_type = #tpu.core_type<tc>, window_params = [{transform_indices = @transform_0, window_bounds = array<i64: 128, 36>}, {pipeline_mode = #tpu.pipeline_mode<synchronous>, transform_indices = @transform_1, window_bounds = array<i64: 36, 32>}, {pipeline_mode = #tpu.pipeline_mode<synchronous>, transform_indices = @transform_2, window_bounds = array<i64: 1, 32>}, {transform_indices = @transform_3, window_bounds = array<i64: 128, 32>}]} {
    %c0 = arith.constant 0 : index
    %c0_0 = arith.constant 0 : index
    %0 = vector.load %arg1[%c0, %c0_0] : memref<128x36xf32, #tpu.memory_space<vmem>>, vector<128x36xf32>
    %c0_1 = arith.constant 0 : index
    %c0_2 = arith.constant 0 : index
    %1 = vector.load %arg2[%c0_1, %c0_2] : memref<36x32xf32, #tpu.memory_space<vmem>>, vector<36x32xf32>
    %cst = arith.constant dense<0.000000e+00> : vector<128x32xf32>
    %2 = tpu.matmul %0, %1, %cst {dimension_numbers = #tpu.dot_dimension_numbers<[1], [0], [0], [1], [0, 0, 1, 1], [], []>} : vector<128x36xf32>, vector<36x32xf32>, vector<128x32xf32> -> vector<128x32xf32>
    %c0_3 = arith.constant 0 : index
    %c0_4 = arith.constant 0 : index
    %3 = vector.load %arg3[%c0_3, %c0_4] : memref<1x32xf32, #tpu.memory_space<vmem>>, vector<1x32xf32>
    %4 = vector.broadcast %3 : vector<1x32xf32> to vector<128x32xf32>
    %5 = arith.addf %2, %4 : vector<128x32xf32>
    %cst_5 = arith.constant 0.000000e+00 : f32
    %6 = vector.broadcast %cst_5 : f32 to vector<128x32xf32>
    %7 = arith.subf %6, %5 : vector<128x32xf32>
    %8 = math.exp %7 : vector<128x32xf32>
    %cst_6 = arith.constant 1.000000e+00 : f32
    %9 = vector.broadcast %cst_6 : f32 to vector<128x32xf32>
    %10 = arith.addf %9, %8 : vector<128x32xf32>
    %cst_7 = arith.constant 1.000000e+00 : f32
    %11 = vector.broadcast %cst_7 : f32 to vector<128x32xf32>
    %12 = arith.divf %11, %10 : vector<128x32xf32>
    %13 = arith.mulf %5, %12 : vector<128x32xf32>
    %c0_8 = arith.constant 0 : index
    %c0_9 = arith.constant 0 : index
    %14 = vector.load %arg4[%c0_8, %c0_9] : memref<128x32xf32, #tpu.memory_space<vmem>>, vector<128x32xf32>
    tpu.vector_store %arg4[%c0_8, %c0_9], %13 {strides = array<i32>} : memref<128x32xf32, #tpu.memory_space<vmem>>, vector<128x32xf32>,
    return
  }
  func.func @transform_0(%arg0: i32) -> (i32, i32) {
    %c0_i32 = arith.constant 0 : i32
    %c0_i32_0 = arith.constant 0 : i32
    return %arg0, %c0_i32 : i32, i32
  }
  func.func @transform_1(%arg0: i32) -> (i32, i32) {
    %c0_i32 = arith.constant 0 : i32
    %c0_i32_0 = arith.constant 0 : i32
    %c0_i32_1 = arith.constant 0 : i32
    return %c0_i32, %c0_i32_0 : i32, i32
  }
  func.func @transform_2(%arg0: i32) -> (i32, i32) {
    %c0_i32 = arith.constant 0 : i32
    %c0_i32_0 = arith.constant 0 : i32
    %c0_i32_1 = arith.constant 0 : i32
    return %c0_i32, %c0_i32_0 : i32, i32
  }
  func.func @transform_3(%arg0: i32) -> (i32, i32) {
    %c0_i32 = arith.constant 0 : i32
    %c0_i32_0 = arith.constant 0 : i32
    return %arg0, %c0_i32 : i32, i32
  }
}

module attributes {stable_mosaic.version = 11 : i64} {
  func.func @_prm_linsk_kernel(%arg0: i32, %arg1: i32, %arg2: memref<1x32x36xf32, #tpu.memory_space<vmem>>, %arg3: memref<1x36x32xf32, #tpu.memory_space<vmem>>, %arg4: memref<1x1x32xf32, #tpu.memory_space<vmem>>, %arg5: memref<1x32x32xf32, #tpu.memory_space<vmem>>, %arg6: memref<32x32xf32, #tpu.memory_space<vmem>>) attributes {dimension_semantics = [#tpu.dimension_semantics<parallel>, #tpu.dimension_semantics<arbitrary>], iteration_bounds = array<i64: 1, 2>, scalar_prefetch = 0 : i64, scratch_operands = 0 : i64, tpu.core_type = #tpu.core_type<tc>, window_params = [{transform_indices = @transform_0, window_bounds = array<i64: 1, 32, 36>}, {transform_indices = @transform_1, window_bounds = array<i64: 1, 36, 32>}, {transform_indices = @transform_2, window_bounds = array<i64: 1, 1, 32>}, {transform_indices = @transform_3, window_bounds = array<i64: 1, 32, 32>}, {transform_indices = @transform_4, window_bounds = array<i64: 32, 32>}]} {
    %c0_i32 = arith.constant 0 : i32
    %0 = arith.cmpi eq, %arg1, %c0_i32 : i32
    %1 = arith.extui %0 : i1 to i32
    %c0_i32_0 = arith.constant 0 : i32
    %2 = arith.cmpi ne, %1, %c0_i32_0 : i32
    scf.if %2 {
      %cst_21 = arith.constant 0.000000e+00 : f32
      %31 = vector.broadcast %cst_21 : f32 to vector<32x32xf32>
      %c0_22 = arith.constant 0 : index
      %c0_23 = arith.constant 0 : index
      %32 = vector.load %arg6[%c0_22, %c0_23] : memref<32x32xf32, #tpu.memory_space<vmem>>, vector<32x32xf32>
      tpu.vector_store %arg6[%c0_22, %c0_23], %31 {strides = array<i32>} : memref<32x32xf32, #tpu.memory_space<vmem>>, vector<32x32xf32>,
    } else {
    }
    %c0 = arith.constant 0 : index
    %c0_1 = arith.constant 0 : index
    %c0_2 = arith.constant 0 : index
    %3 = vector.load %arg2[%c0, %c0_1, %c0_2] : memref<1x32x36xf32, #tpu.memory_space<vmem>>, vector<1x32x36xf32>
    %4 = vector.shape_cast %3 : vector<1x32x36xf32> to vector<32x36xf32>
    %c0_3 = arith.constant 0 : index
    %c0_4 = arith.constant 0 : index
    %c0_5 = arith.constant 0 : index
    %5 = vector.load %arg3[%c0_3, %c0_4, %c0_5] : memref<1x36x32xf32, #tpu.memory_space<vmem>>, vector<1x36x32xf32>
    %6 = vector.shape_cast %5 : vector<1x36x32xf32> to vector<36x32xf32>
    %cst = arith.constant dense<0.000000e+00> : vector<32x32xf32>
    %7 = tpu.matmul %4, %6, %cst {dimension_numbers = #tpu.dot_dimension_numbers<[1], [0], [0], [1], [0, 0, 1, 1], [], []>} : vector<32x36xf32>, vector<36x32xf32>, vector<32x32xf32> -> vector<32x32xf32>
    %c0_6 = arith.constant 0 : index
    %c0_7 = arith.constant 0 : index
    %c0_8 = arith.constant 0 : index
    %8 = vector.load %arg4[%c0_6, %c0_7, %c0_8] : memref<1x1x32xf32, #tpu.memory_space<vmem>>, vector<1x1x32xf32>
    %9 = vector.shape_cast %8 : vector<1x1x32xf32> to vector<1x32xf32>
    %10 = vector.broadcast %9 : vector<1x32xf32> to vector<32x32xf32>
    %11 = arith.addf %7, %10 : vector<32x32xf32>
    %cst_9 = arith.constant 5.000000e-01 : f32
    %12 = vector.broadcast %cst_9 : f32 to vector<32x32xf32>
    %13 = arith.mulf %12, %11 : vector<32x32xf32>
    %cst_10 = arith.constant 4.471500e-02 : f32
    %14 = vector.broadcast %cst_10 : f32 to vector<32x32xf32>
    %15 = arith.mulf %14, %11 : vector<32x32xf32>
    %16 = arith.mulf %15, %11 : vector<32x32xf32>
    %17 = arith.mulf %16, %11 : vector<32x32xf32>
    %18 = arith.addf %11, %17 : vector<32x32xf32>
    %cst_11 = arith.constant 0.797884583 : f32
    %19 = vector.broadcast %cst_11 : f32 to vector<32x32xf32>
    %20 = arith.mulf %19, %18 : vector<32x32xf32>
    %21 = math.tanh %20 : vector<32x32xf32>
    %cst_12 = arith.constant 1.000000e+00 : f32
    %22 = vector.broadcast %cst_12 : f32 to vector<32x32xf32>
    %23 = arith.addf %22, %21 : vector<32x32xf32>
    %24 = arith.mulf %13, %23 : vector<32x32xf32>
    %c0_13 = arith.constant 0 : index
    %c0_14 = arith.constant 0 : index
    %25 = vector.load %arg6[%c0_13, %c0_14] : memref<32x32xf32, #tpu.memory_space<vmem>>, vector<32x32xf32>
    %c0_15 = arith.constant 0 : index
    %c0_16 = arith.constant 0 : index
    %c0_17 = arith.constant 0 : index
    %26 = vector.load %arg5[%c0_15, %c0_16, %c0_17] : memref<1x32x32xf32, #tpu.memory_space<vmem>>, vector<1x32x32xf32>
    %27 = vector.shape_cast %26 : vector<1x32x32xf32> to vector<32x32xf32>
    %cst_18 = arith.constant dense<0.000000e+00> : vector<32x32xf32>
    %28 = tpu.matmul %24, %27, %cst_18 {dimension_numbers = #tpu.dot_dimension_numbers<[1], [0], [0], [1], [0, 0, 1, 1], [], []>} : vector<32x32xf32>, vector<32x32xf32>, vector<32x32xf32> -> vector<32x32xf32>
    %29 = arith.addf %25, %28 : vector<32x32xf32>
    %c0_19 = arith.constant 0 : index
    %c0_20 = arith.constant 0 : index
    %30 = vector.load %arg6[%c0_19, %c0_20] : memref<32x32xf32, #tpu.memory_space<vmem>>, vector<32x32xf32>
    tpu.vector_store %arg6[%c0_19, %c0_20], %29 {strides = array<i32>} : memref<32x32xf32, #tpu.memory_space<vmem>>, vector<32x32xf32>,
    return
  }
  func.func @transform_0(%arg0: i32, %arg1: i32) -> (i32, i32, i32) {
    %c0_i32 = arith.constant 0 : i32
    %c0_i32_0 = arith.constant 0 : i32
    return %arg1, %arg0, %c0_i32 : i32, i32, i32
  }
  func.func @transform_1(%arg0: i32, %arg1: i32) -> (i32, i32, i32) {
    %c0_i32 = arith.constant 0 : i32
    %c0_i32_0 = arith.constant 0 : i32
    %c0_i32_1 = arith.constant 0 : i32
    return %arg1, %c0_i32, %c0_i32_0 : i32, i32, i32
  }
  func.func @transform_2(%arg0: i32, %arg1: i32) -> (i32, i32, i32) {
    %c0_i32 = arith.constant 0 : i32
    %c0_i32_0 = arith.constant 0 : i32
    %c0_i32_1 = arith.constant 0 : i32
    return %arg1, %c0_i32, %c0_i32_0 : i32, i32, i32
  }
  func.func @transform_3(%arg0: i32, %arg1: i32) -> (i32, i32, i32) {
    %c0_i32 = arith.constant 0 : i32
    %c0_i32_0 = arith.constant 0 : i32
    %c0_i32_1 = arith.constant 0 : i32
    return %arg1, %c0_i32, %c0_i32_0 : i32, i32, i32
  }
  func.func @transform_4(%arg0: i32, %arg1: i32) -> (i32, i32) {
    %c0_i32 = arith.constant 0 : i32
    %c0_i32_0 = arith.constant 0 : i32
    return %arg0, %c0_i32 : i32, i32
  }
}

module attributes {stable_mosaic.version = 11 : i64} {
  func.func @_conv_bn_silu_combine_kernel(%arg0: i32, %arg1: memref<32x288xf32, #tpu.memory_space<vmem>>, %arg2: memref<288x32xf32, #tpu.memory_space<vmem>>, %arg3: memref<1x32xf32, #tpu.memory_space<vmem>>, %arg4: memref<1x32xf32, #tpu.memory_space<vmem>>, %arg5: memref<1x32xf32, #tpu.memory_space<vmem>>, %arg6: memref<32x32xf32, #tpu.memory_space<vmem>>, %arg7: memref<1x32xf32, #tpu.memory_space<vmem>>, %arg8: memref<1x32xf32, #tpu.memory_space<vmem>>, %arg9: memref<32x32xf32, #tpu.memory_space<vmem>>) attributes {dimension_semantics = [#tpu.dimension_semantics<parallel>], iteration_bounds = array<i64: 1>, scalar_prefetch = 0 : i64, scratch_operands = 0 : i64, tpu.core_type = #tpu.core_type<tc>, window_params = [{transform_indices = @transform_0, window_bounds = array<i64: 32, 288>}, {pipeline_mode = #tpu.pipeline_mode<synchronous>, transform_indices = @transform_1, window_bounds = array<i64: 288, 32>}, {pipeline_mode = #tpu.pipeline_mode<synchronous>, transform_indices = @transform_2, window_bounds = array<i64: 1, 32>}, {pipeline_mode = #tpu.pipeline_mode<synchronous>, transform_indices = @transform_3, window_bounds = array<i64: 1, 32>}, {pipeline_mode = #tpu.pipeline_mode<synchronous>, transform_indices = @transform_4, window_bounds = array<i64: 1, 32>}, {transform_indices = @transform_5, window_bounds = array<i64: 32, 32>}, {pipeline_mode = #tpu.pipeline_mode<synchronous>, transform_indices = @transform_6, window_bounds = array<i64: 1, 32>}, {pipeline_mode = #tpu.pipeline_mode<synchronous>, transform_indices = @transform_7, window_bounds = array<i64: 1, 32>}, {transform_indices = @transform_8, window_bounds = array<i64: 32, 32>}]} {
    %c0 = arith.constant 0 : index
    %c0_0 = arith.constant 0 : index
    %0 = vector.load %arg1[%c0, %c0_0] : memref<32x288xf32, #tpu.memory_space<vmem>>, vector<32x288xf32>
    %c0_1 = arith.constant 0 : index
    %c0_2 = arith.constant 0 : index
    %1 = vector.load %arg2[%c0_1, %c0_2] : memref<288x32xf32, #tpu.memory_space<vmem>>, vector<288x32xf32>
    %cst = arith.constant dense<0.000000e+00> : vector<32x32xf32>
    %2 = tpu.matmul %0, %1, %cst {dimension_numbers = #tpu.dot_dimension_numbers<[1], [0], [0], [1], [0, 0, 1, 1], [], []>} : vector<32x288xf32>, vector<288x32xf32>, vector<32x32xf32> -> vector<32x32xf32>
    %c0_3 = arith.constant 0 : index
    %c0_4 = arith.constant 0 : index
    %3 = vector.load %arg3[%c0_3, %c0_4] : memref<1x32xf32, #tpu.memory_space<vmem>>, vector<1x32xf32>
    %4 = vector.broadcast %3 : vector<1x32xf32> to vector<32x32xf32>
    %5 = arith.addf %2, %4 : vector<32x32xf32>
    %c0_5 = arith.constant 0 : index
    %c0_6 = arith.constant 0 : index
    %6 = vector.load %arg4[%c0_5, %c0_6] : memref<1x32xf32, #tpu.memory_space<vmem>>, vector<1x32xf32>
    %7 = vector.broadcast %6 : vector<1x32xf32> to vector<32x32xf32>
    %8 = arith.mulf %5, %7 : vector<32x32xf32>
    %c0_7 = arith.constant 0 : index
    %c0_8 = arith.constant 0 : index
    %9 = vector.load %arg5[%c0_7, %c0_8] : memref<1x32xf32, #tpu.memory_space<vmem>>, vector<1x32xf32>
    %10 = vector.broadcast %9 : vector<1x32xf32> to vector<32x32xf32>
    %11 = arith.addf %8, %10 : vector<32x32xf32>
    %cst_9 = arith.constant 0.000000e+00 : f32
    %12 = vector.broadcast %cst_9 : f32 to vector<32x32xf32>
    %13 = arith.subf %12, %11 : vector<32x32xf32>
    %14 = math.exp %13 : vector<32x32xf32>
    %cst_10 = arith.constant 1.000000e+00 : f32
    %15 = vector.broadcast %cst_10 : f32 to vector<32x32xf32>
    %16 = arith.addf %15, %14 : vector<32x32xf32>
    %cst_11 = arith.constant 1.000000e+00 : f32
    %17 = vector.broadcast %cst_11 : f32 to vector<32x32xf32>
    %18 = arith.divf %17, %16 : vector<32x32xf32>
    %19 = arith.mulf %11, %18 : vector<32x32xf32>
    %c0_12 = arith.constant 0 : index
    %c0_13 = arith.constant 0 : index
    %20 = vector.load %arg6[%c0_12, %c0_13] : memref<32x32xf32, #tpu.memory_space<vmem>>, vector<32x32xf32>
    %c0_14 = arith.constant 0 : index
    %c0_15 = arith.constant 0 : index
    %21 = vector.load %arg7[%c0_14, %c0_15] : memref<1x32xf32, #tpu.memory_space<vmem>>, vector<1x32xf32>
    %22 = vector.broadcast %21 : vector<1x32xf32> to vector<32x32xf32>
    %23 = arith.mulf %20, %22 : vector<32x32xf32>
    %c0_16 = arith.constant 0 : index
    %c0_17 = arith.constant 0 : index
    %24 = vector.load %arg8[%c0_16, %c0_17] : memref<1x32xf32, #tpu.memory_space<vmem>>, vector<1x32xf32>
    %25 = vector.broadcast %24 : vector<1x32xf32> to vector<32x32xf32>
    %26 = arith.mulf %19, %25 : vector<32x32xf32>
    %27 = arith.addf %23, %26 : vector<32x32xf32>
    %c0_18 = arith.constant 0 : index
    %c0_19 = arith.constant 0 : index
    %28 = vector.load %arg9[%c0_18, %c0_19] : memref<32x32xf32, #tpu.memory_space<vmem>>, vector<32x32xf32>
    tpu.vector_store %arg9[%c0_18, %c0_19], %27 {strides = array<i32>} : memref<32x32xf32, #tpu.memory_space<vmem>>, vector<32x32xf32>,
    return
  }
  func.func @transform_0(%arg0: i32) -> (i32, i32) {
    %c0_i32 = arith.constant 0 : i32
    %c0_i32_0 = arith.constant 0 : i32
    return %arg0, %c0_i32 : i32, i32
  }
  func.func @transform_1(%arg0: i32) -> (i32, i32) {
    %c0_i32 = arith.constant 0 : i32
    %c0_i32_0 = arith.constant 0 : i32
    %c0_i32_1 = arith.constant 0 : i32
    return %c0_i32, %c0_i32_0 : i32, i32
  }
  func.func @transform_2(%arg0: i32) -> (i32, i32) {
    %c0_i32 = arith.constant 0 : i32
    %c0_i32_0 = arith.constant 0 : i32
    %c0_i32_1 = arith.constant 0 : i32
    return %c0_i32, %c0_i32_0 : i32, i32
  }
  func.func @transform_3(%arg0: i32) -> (i32, i32) {
    %c0_i32 = arith.constant 0 : i32
    %c0_i32_0 = arith.constant 0 : i32
    %c0_i32_1 = arith.constant 0 : i32
    return %c0_i32, %c0_i32_0 : i32, i32
  }
  func.func @transform_4(%arg0: i32) -> (i32, i32) {
    %c0_i32 = arith.constant 0 : i32
    %c0_i32_0 = arith.constant 0 : i32
    %c0_i32_1 = arith.constant 0 : i32
    return %c0_i32, %c0_i32_0 : i32, i32
  }
  func.func @transform_5(%arg0: i32) -> (i32, i32) {
    %c0_i32 = arith.constant 0 : i32
    %c0_i32_0 = arith.constant 0 : i32
    return %arg0, %c0_i32 : i32, i32
  }
  func.func @transform_6(%arg0: i32) -> (i32, i32) {
    %c0_i32 = arith.constant 0 : i32
    %c0_i32_0 = arith.constant 0 : i32
    %c0_i32_1 = arith.constant 0 : i32
    return %c0_i32, %c0_i32_0 : i32, i32
  }
  func.func @transform_7(%arg0: i32) -> (i32, i32) {
    %c0_i32 = arith.constant 0 : i32
    %c0_i32_0 = arith.constant 0 : i32
    %c0_i32_1 = arith.constant 0 : i32
    return %c0_i32, %c0_i32_0 : i32, i32
  }
  func.func @transform_8(%arg0: i32) -> (i32, i32) {
    %c0_i32 = arith.constant 0 : i32
    %c0_i32_0 = arith.constant 0 : i32
    return %arg0, %c0_i32 : i32, i32
  }
}

</mosaic_0001>

<llo_original>
// kernel: downsampling_forward.4
$region0: #{downsampling_forward.4}
  #allocation0 [shape = 'u32[]', space=smem, size = 0x4, offset = 0x4, fixed_abs, tag = 'smem constant byte address 0x4 - core index']
  #allocation1 [shape = 'u32[144,128]{1,0:T(1,128)}', space=vmem, size = 0x12000, scoped, tag = 'internal scratch']
  %s0 = inlined_call_operand.vmem [shape: f32[128,36], index: 0, kind: input, shape index: {}]
  %s1 = inlined_call_operand.vmem [shape: f32[36,32], index: 1, kind: input, shape index: {}]
  %s2 = inlined_call_operand.vmem [shape: f32[1,32], index: 2, kind: input, shape index: {}]
  %s3 = inlined_call_operand.vmem [shape: f32[128,32], index: 3, kind: output, shape index: {}]
  %s4 = sld [smem:[#allocation0]]
  $region22: #{downsampling_forward.4} parent=0
    _
  %s6 = ssub.s32 1, %s4
  %s7 = scalar_select 0, %s6, %s4
  // Predicated region
  $region2: #{downsampling_forward.4} parent=0 // pred_check
    _
  $region3: #{downsampling_forward.4} parent=0 // pred_check_branch
    %9 = sbr.rel (0) target = $region5
  $region4: #{downsampling_forward.4} parent=0 // pred_region
    _
  $region5: #{downsampling_forward.4} parent=0 // pred_fallthru
    _
  // Predicated region
  $region6: #{downsampling_forward.4} parent=0 // pred_check
    _
  $region7: #{downsampling_forward.4} parent=0 // pred_check_branch
    %11 = sbr.rel (0) target = $region9
  $region8: #{downsampling_forward.4} parent=0 // pred_region
    _
  $region9: #{downsampling_forward.4} parent=0 // pred_fallthru
    _
  // Predicated region
  $region10: #{downsampling_forward.4} parent=0 // pred_check
    _
  $region11: #{downsampling_forward.4} parent=0 // pred_check_branch
    %13 = sbr.rel (0) target = $region13
  $region12: #{downsampling_forward.4} parent=0 // pred_region
    _
  $region13: #{downsampling_forward.4} parent=0 // pred_fallthru
    _
  %v14 = vld [vmem:[%s0] sm:$0xff]
  %v15 = vld [vmem:[%s0 + $0x8] sm:$0xff]
  %v16 = vld [vmem:[%s0 + $0x10] sm:$0xff]
  %v17 = vld [vmem:[%s0 + $0x18] sm:$0xff]
  %v18 = vld [vmem:[%s0 + $0x20] sm:$0xff]
  %v19 = vld [vmem:[%s0 + $0x28] sm:$0xff]
  %v20 = vld [vmem:[%s0 + $0x30] sm:$0xff]
  %v21 = vld [vmem:[%s0 + $0x38] sm:$0xff]
  %v22 = vld [vmem:[%s0 + $0x40] sm:$0xff]
  %v23 = vld [vmem:[%s0 + $0x48] sm:$0xff]
  %v24 = vld [vmem:[%s0 + $0x50] sm:$0xff]
  %v25 = vld [vmem:[%s0 + $0x58] sm:$0xff]
  %v26 = vld [vmem:[%s0 + $0x60] sm:$0xff]
  %v27 = vld [vmem:[%s0 + $0x68] sm:$0xff]
  %v28 = vld [vmem:[%s0 + $0x70] sm:$0xff]
  %v29 = vld [vmem:[%s0 + $0x78] sm:$0xff]
  %v30 = vld [vmem:[%s1] sm:$0xff]
  %v31 = vld [vmem:[%s1 + $0x8] sm:$0xff]
  %v32 = vld [vmem:[%s1 + $0x10] sm:$0xff]
  %v33 = vld [vmem:[%s1 + $0x18] sm:$0xff]
  %v34 = vld [vmem:[%s1 + $0x20] sm:$0xf]
  %v35 = vld [vmem:[%s2] sm:$0x1]
  %v37 = vlaneseq
  %v38 = vshrl.u32 %v37, 7
  %v39 = vsub.s32 0, %v38
  %v40 = vrot.slane %v35, %v39
  %vm42 = vcmask 293888
  %v44 = vsel %vm42, %v14, 0
  %v47 = vsel %vm42, %v15, 0
  %v50 = vsel %vm42, %v16, 0
  %v53 = vsel %vm42, %v17, 0
  %v56 = vsel %vm42, %v18, 0
  %v59 = vsel %vm42, %v19, 0
  %v62 = vsel %vm42, %v20, 0
  %v65 = vsel %vm42, %v21, 0
  %v68 = vsel %vm42, %v22, 0
  %v71 = vsel %vm42, %v23, 0
  %v74 = vsel %vm42, %v24, 0
  %v77 = vsel %vm42, %v25, 0
  %v80 = vsel %vm42, %v26, 0
  %v83 = vsel %vm42, %v27, 0
  %v86 = vsel %vm42, %v28, 0
  %v89 = vsel %vm42, %v29, 0
  %vm91 = vcmask 1043456
  %v93 = vsel %vm91, %v34, 0
  %95 = vmatprep.subr.mxu0 0.0
  %96 = vmatpush1.msra.mxu0 %v30
  %97 = vmatprep.subr.mxu0 0.0
  %98 = vmatpush1.msra.mxu0 %v31
  %99 = vmatprep.subr.mxu0 0.0
  %100 = vmatpush1.msra.mxu0 %v32
  %101 = vmatprep.subr.mxu0 0.0
  %102 = vmatpush1.msra.mxu0 %v33
  %103 = vmatprep.subr.mxu0 0.0
  %104 = vmatpush1.msra.mxu0 %v93
  %105 = vmatprep.subr.mxu0 0.0
  %106 = vmatpush1.msra.mxu0 0.0
  %107 = vmatprep.subr.mxu0 0.0
  %108 = vmatpush1.msra.mxu0 0.0
  %109 = vmatprep.subr.mxu0 0.0
  %110 = vmatpush1.msra.mxu0 0.0
  %111 = vmatprep.subr.mxu0 0.0
  %112 = vmatpush1.msra.mxu0 0.0
  %113 = vmatprep.subr.mxu0 0.0
  %114 = vmatpush1.msra.mxu0 0.0
  %115 = vmatprep.subr.mxu0 0.0
  %116 = vmatpush1.msra.mxu0 0.0
  %117 = vmatprep.subr.mxu0 0.0
  %118 = vmatpush1.msra.mxu0 0.0
  %119 = vmatprep.subr.mxu0 0.0
  %120 = vmatpush1.msra.mxu0 0.0
  %121 = vmatprep.subr.mxu0 0.0
  %122 = vmatpush1.msra.mxu0 0.0
  %123 = vmatprep.subr.mxu0 0.0
  %124 = vmatpush1.msra.mxu0 0.0
  %125 = vmatprep.subr.mxu0 0.0
  %126 = vmatpush1.msra.mxu0 0.0
  %127 = vmatprep.subr.mxu0 0.0
  %128 = vmatpush1.msra.mxu0 0.0
  %129 = vmatprep.subr.mxu0 0.0
  %130 = vmatpush1.msra.mxu0 0.0
  %131 = vmatprep.subr.mxu0 0.0
  %132 = vmatpush1.msra.mxu0 0.0
  %133 = vmatprep.subr.mxu0 0.0
  %134 = vmatpush1.msra.mxu0 0.0
  %135 = vmatprep.subr.mxu0 0.0
  %136 = vmatpush1.msra.mxu0 0.0
  %137 = vmatprep.subr.mxu0 0.0
  %138 = vmatpush1.msra.mxu0 0.0
  %139 = vmatprep.subr.mxu0 0.0
  %140 = vmatpush1.msra.mxu0 0.0
  %141 = vmatprep.subr.mxu0 0.0
  %142 = vmatpush1.msra.mxu0 0.0
  %143 = vmatprep.subr.mxu0 0.0
  %144 = vmatpush1.msra.mxu0 0.0
  %145 = vmatprep.subr.mxu0 0.0
  %146 = vmatpush1.msra.mxu0 0.0
  %147 = vmatprep.subr.mxu0 0.0
  %148 = vmatpush1.msra.mxu0 0.0
  %149 = vmatprep.subr.mxu0 0.0
  %150 = vmatpush1.msra.mxu0 0.0
  %151 = vmatprep.subr.mxu0 0.0
  %152 = vmatpush1.msra.mxu0 0.0
  %153 = vmatprep.subr.mxu0 0.0
  %154 = vmatpush1.msra.mxu0 0.0
  %155 = vmatprep.subr.mxu0 0.0
  %156 = vmatpush1.msra.mxu0 0.0
  %157 = vmatprep.subr.mxu0 0.0
  %158 = vmatpush1.msra.mxu0 0.0
  %159 = vmatprep.mubr.f32.mxu0 0.0
  %160 = vmatmul.mubr.f32.gmra.mrb[0].mxu0 %v44
  %v161 = vpop.f32.mrb[0].mxu0
  %v162 = vadd.f32 %v40, %v161
  %v163 = vpop.f32.mrb[0].mxu0
  %164 = vmatprep.mubr.f32.mxu0 0.0
  %165 = vmatmul.mubr.f32.gmra.mrb[0].mxu0 %v47
  %v166 = vpop.f32.mrb[0].mxu0
  %v167 = vadd.f32 %v40, %v166
  %v168 = vpop.f32.mrb[0].mxu0
  %169 = vmatprep.mubr.f32.mxu0 0.0
  %170 = vmatmul.mubr.f32.gmra.mrb[0].mxu0 %v50
  %v171 = vpop.f32.mrb[0].mxu0
  %v172 = vadd.f32 %v40, %v171
  %v173 = vpop.f32.mrb[0].mxu0
  %174 = vmatprep.mubr.f32.mxu0 0.0
  %175 = vmatmul.mubr.f32.gmra.mrb[0].mxu0 %v53
  %v176 = vpop.f32.mrb[0].mxu0
  %v177 = vadd.f32 %v40, %v176
  %v178 = vpop.f32.mrb[0].mxu0
  %179 = vmatprep.mubr.f32.mxu0 0.0
  %180 = vmatmul.mubr.f32.gmra.mrb[0].mxu0 %v56
  %v181 = vpop.f32.mrb[0].mxu0
  %v182 = vadd.f32 %v40, %v181
  %v183 = vpop.f32.mrb[0].mxu0
  %184 = vmatprep.mubr.f32.mxu0 0.0
  %185 = vmatmul.mubr.f32.gmra.mrb[0].mxu0 %v59
  %v186 = vpop.f32.mrb[0].mxu0
  %v187 = vadd.f32 %v40, %v186
  %v188 = vpop.f32.mrb[0].mxu0
  %189 = vmatprep.mubr.f32.mxu0 0.0
  %190 = vmatmul.mubr.f32.gmra.mrb[0].mxu0 %v62
  %v191 = vpop.f32.mrb[0].mxu0
  %v192 = vadd.f32 %v40, %v191
  %v193 = vpop.f32.mrb[0].mxu0
  %194 = vmatprep.mubr.f32.mxu0 0.0
  %195 = vmatmul.mubr.f32.gmra.mrb[0].mxu0 %v65
  %v196 = vpop.f32.mrb[0].mxu0
  %v197 = vadd.f32 %v40, %v196
  %v198 = vpop.f32.mrb[0].mxu0
  %199 = vmatprep.mubr.f32.mxu0 0.0
  %200 = vmatmul.mubr.f32.gmra.mrb[0].mxu0 %v68
  %v201 = vpop.f32.mrb[0].mxu0
  %v202 = vadd.f32 %v40, %v201
  %v203 = vpop.f32.mrb[0].mxu0
  %204 = vmatprep.mubr.f32.mxu0 0.0
  %205 = vmatmul.mubr.f32.gmra.mrb[0].mxu0 %v71
  %v206 = vpop.f32.mrb[0].mxu0
  %v207 = vadd.f32 %v40, %v206
  %v208 = vpop.f32.mrb[0].mxu0
  %209 = vmatprep.mubr.f32.mxu0 0.0
  %210 = vmatmul.mubr.f32.gmra.mrb[0].mxu0 %v74
  %v211 = vpop.f32.mrb[0].mxu0
  %v212 = vadd.f32 %v40, %v211
  %v213 = vpop.f32.mrb[0].mxu0
  %214 = vmatprep.mubr.f32.mxu0 0.0
  %215 = vmatmul.mubr.f32.gmra.mrb[0].mxu0 %v77
  %v216 = vpop.f32.mrb[0].mxu0
  %v217 = vadd.f32 %v40, %v216
  %v218 = vpop.f32.mrb[0].mxu0
  %219 = vmatprep.mubr.f32.mxu0 0.0
  %220 = vmatmul.mubr.f32.gmra.mrb[0].mxu0 %v80
  %v221 = vpop.f32.mrb[0].mxu0
  %v222 = vadd.f32 %v40, %v221
  %v223 = vpop.f32.mrb[0].mxu0
  %224 = vmatprep.mubr.f32.mxu0 0.0
  %225 = vmatmul.mubr.f32.gmra.mrb[0].mxu0 %v83
  %v226 = vpop.f32.mrb[0].mxu0
  %v227 = vadd.f32 %v40, %v226
  %v228 = vpop.f32.mrb[0].mxu0
  %229 = vmatprep.mubr.f32.mxu0 0.0
  %230 = vmatmul.mubr.f32.gmra.mrb[0].mxu0 %v86
  %v231 = vpop.f32.mrb[0].mxu0
  %v232 = vadd.f32 %v40, %v231
  %v233 = vpop.f32.mrb[0].mxu0
  %234 = vmatprep.mubr.f32.mxu0 0.0
  %235 = vmatmul.mubr.f32.gmra.mrb[0].mxu0 %v89
  %v236 = vpop.f32.mrb[0].mxu0
  %v237 = vadd.f32 %v40, %v236
  %v238 = vpop.f32.mrb[0].mxu0
  %239 = vdwg.mxu0
  %v240 = vsub.f32 0.0, %v162
  %v241 = vsub.f32 0.0, %v167
  %v242 = vsub.f32 0.0, %v172
  %v243 = vsub.f32 0.0, %v177
  %v244 = vsub.f32 0.0, %v182
  %v245 = vsub.f32 0.0, %v187
  %v246 = vsub.f32 0.0, %v192
  %v247 = vsub.f32 0.0, %v197
  %v248 = vsub.f32 0.0, %v202
  %v249 = vsub.f32 0.0, %v207
  %v250 = vsub.f32 0.0, %v212
  %v251 = vsub.f32 0.0, %v217
  %v252 = vsub.f32 0.0, %v222
  %v253 = vsub.f32 0.0, %v227
  %v254 = vsub.f32 0.0, %v232
  %v255 = vsub.f32 0.0, %v237
  %v256 = vmul.f32 %v240, 1.442695
  %v257 = vpow.pop %v256
  %v258 = vmul.f32 %v241, 1.442695
  %v259 = vpow.pop %v258
  %v260 = vmul.f32 %v242, 1.442695
  %v261 = vpow.pop %v260
  %v262 = vmul.f32 %v243, 1.442695
  %v263 = vpow.pop %v262
  %v264 = vmul.f32 %v244, 1.442695
  %v265 = vpow.pop %v264
  %v266 = vmul.f32 %v245, 1.442695
  %v267 = vpow.pop %v266
  %v268 = vmul.f32 %v246, 1.442695
  %v269 = vpow.pop %v268
  %v270 = vmul.f32 %v247, 1.442695
  %v271 = vpow.pop %v270
  %v272 = vmul.f32 %v248, 1.442695
  %v273 = vpow.pop %v272
  %v274 = vmul.f32 %v249, 1.442695
  %v275 = vpow.pop %v274
  %v276 = vmul.f32 %v250, 1.442695
  %v277 = vpow.pop %v276
  %v278 = vmul.f32 %v251, 1.442695
  %v279 = vpow.pop %v278
  %v280 = vmul.f32 %v252, 1.442695
  %v281 = vpow.pop %v280
  %v282 = vmul.f32 %v253, 1.442695
  %v283 = vpow.pop %v282
  %v284 = vmul.f32 %v254, 1.442695
  %v285 = vpow.pop %v284
  %v286 = vmul.f32 %v255, 1.442695
  %v287 = vpow.pop %v286
  %v288 = vadd.f32 %v257, 1.0
  %v289 = vadd.f32 %v259, 1.0
  %v290 = vadd.f32 %v261, 1.0
  %v291 = vadd.f32 %v263, 1.0
  %v292 = vadd.f32 %v265, 1.0
  %v293 = vadd.f32 %v267, 1.0
  %v294 = vadd.f32 %v269, 1.0
  %v295 = vadd.f32 %v271, 1.0
  %v296 = vadd.f32 %v273, 1.0
  %v297 = vadd.f32 %v275, 1.0
  %v298 = vadd.f32 %v277, 1.0
  %v299 = vadd.f32 %v279, 1.0
  %v300 = vadd.f32 %v281, 1.0
  %v301 = vadd.f32 %v283, 1.0
  %v302 = vadd.f32 %v285, 1.0
  %v303 = vadd.f32 %v287, 1.0
  %v304 = vrcp.pop %v288
  %v305 = vmul.f32 1.0, %v304
  %v306 = vrcp.pop %v289
  %v307 = vmul.f32 1.0, %v306
  %v308 = vrcp.pop %v290
  %v309 = vmul.f32 1.0, %v308
  %v310 = vrcp.pop %v291
  %v311 = vmul.f32 1.0, %v310
  %v312 = vrcp.pop %v292
  %v313 = vmul.f32 1.0, %v312
  %v314 = vrcp.pop %v293
  %v315 = vmul.f32 1.0, %v314
  %v316 = vrcp.pop %v294
  %v317 = vmul.f32 1.0, %v316
  %v318 = vrcp.pop %v295
  %v319 = vmul.f32 1.0, %v318
  %v320 = vrcp.pop %v296
  %v321 = vmul.f32 1.0, %v320
  %v322 = vrcp.pop %v297
  %v323 = vmul.f32 1.0, %v322
  %v324 = vrcp.pop %v298
  %v325 = vmul.f32 1.0, %v324
  %v326 = vrcp.pop %v299
  %v327 = vmul.f32 1.0, %v326
  %v328 = vrcp.pop %v300
  %v329 = vmul.f32 1.0, %v328
  %v330 = vrcp.pop %v301
  %v331 = vmul.f32 1.0, %v330
  %v332 = vrcp.pop %v302
  %v333 = vmul.f32 1.0, %v332
  %v334 = vrcp.pop %v303
  %v335 = vmul.f32 1.0, %v334
  %v336 = vmul.f32 %v162, %v305
  %v337 = vmul.f32 %v167, %v307
  %v338 = vmul.f32 %v172, %v309
  %v339 = vmul.f32 %v177, %v311
  %v340 = vmul.f32 %v182, %v313
  %v341 = vmul.f32 %v187, %v315
  %v342 = vmul.f32 %v192, %v317
  %v343 = vmul.f32 %v197, %v319
  %v344 = vmul.f32 %v202, %v321
  %v345 = vmul.f32 %v207, %v323
  %v346 = vmul.f32 %v212, %v325
  %v347 = vmul.f32 %v217, %v327
  %v348 = vmul.f32 %v222, %v329
  %v349 = vmul.f32 %v227, %v331
  %v350 = vmul.f32 %v232, %v333
  %v351 = vmul.f32 %v237, %v335
  %vm352 = vcmask 261120
  %353 = vst.msk [vmem:[%s3] sm:$0xff] %vm352, %v336
  %354 = vst.msk [vmem:[%s3 + $0x8] sm:$0xff] %vm352, %v337
  %355 = vst.msk [vmem:[%s3 + $0x10] sm:$0xff] %vm352, %v338
  %356 = vst.msk [vmem:[%s3 + $0x18] sm:$0xff] %vm352, %v339
  %357 = vst.msk [vmem:[%s3 + $0x20] sm:$0xff] %vm352, %v340
  %358 = vst.msk [vmem:[%s3 + $0x28] sm:$0xff] %vm352, %v341
  %359 = vst.msk [vmem:[%s3 + $0x30] sm:$0xff] %vm352, %v342
  %360 = vst.msk [vmem:[%s3 + $0x38] sm:$0xff] %vm352, %v343
  %361 = vst.msk [vmem:[%s3 + $0x40] sm:$0xff] %vm352, %v344
  %362 = vst.msk [vmem:[%s3 + $0x48] sm:$0xff] %vm352, %v345
  %363 = vst.msk [vmem:[%s3 + $0x50] sm:$0xff] %vm352, %v346
  %364 = vst.msk [vmem:[%s3 + $0x58] sm:$0xff] %vm352, %v347
  %365 = vst.msk [vmem:[%s3 + $0x60] sm:$0xff] %vm352, %v348
  %366 = vst.msk [vmem:[%s3 + $0x68] sm:$0xff] %vm352, %v349
  %367 = vst.msk [vmem:[%s3 + $0x70] sm:$0xff] %vm352, %v350
  %368 = vst.msk [vmem:[%s3 + $0x78] sm:$0xff] %vm352, %v351
  // Predicated region
  $region14: #{downsampling_forward.4} parent=0 // pred_check
    _
  $region15: #{downsampling_forward.4} parent=0 // pred_check_branch
    %370 = sbr.rel (0) target = $region17
  $region16: #{downsampling_forward.4} parent=0 // pred_region
    _
  $region17: #{downsampling_forward.4} parent=0 // pred_fallthru
    _
  // Predicated region
  $region18: #{downsampling_forward.4} parent=0 // pred_check
    _
  $region19: #{downsampling_forward.4} parent=0 // pred_check_branch
    %372 = sbr.rel (0) target = $region21
  $region20: #{downsampling_forward.4} parent=0 // pred_region
    _
  $region21: #{downsampling_forward.4} parent=0 // pred_fallthru
    _

// kernel: downsampling_forward.3
$region0: #{downsampling_forward.3}
  #allocation0 [shape = 'u32[]', space=smem, size = 0x4, offset = 0x4, fixed_abs, tag = 'smem constant byte address 0x4 - core index']
  #allocation1 [shape = 'u32[144,128]{1,0:T(1,128)}', space=vmem, size = 0x12000, scoped, tag = 'internal scratch']
  %s0 = inlined_call_operand.vmem [shape: f32[2,32,36], index: 0, kind: input, shape index: {}]
  %s1 = inlined_call_operand.vmem [shape: f32[2,36,32], index: 1, kind: input, shape index: {}]
  %s2 = inlined_call_operand.vmem [shape: f32[2,1,32], index: 2, kind: input, shape index: {}]
  %s3 = inlined_call_operand.vmem [shape: f32[2,32,32], index: 3, kind: input, shape index: {}]
  %s4 = inlined_call_operand.vmem [shape: f32[32,32], index: 4, kind: output, shape index: {}]
  %s5 = sld [smem:[#allocation0]]
  $region53: #{downsampling_forward.3} parent=0
    _
  %s7 = ssub.s32 1, %s5
  %s8 = scalar_select 0, %s7, %s5
  loop: start=0, step=1, limit=4
  $region2: #{downsampling_forward.3} parent=0 // loop_pre_header
    _
  $region3: #{downsampling_forward.3} parent=0 // loop_header
    %s10 = sphi 0, %s14
    %p11 = scmp.ge.s32.totalorder %s10, 4
    %s17 = sphi 0, %s29
    %s18 = sphi 0, %s25
    %s19 = sphi 0, %s17
    %s20 = sphi 0, %s18
    %s21 = sphi 0, %s19
    %s22 = sphi 0, %s20
    %s34 = sphi 0, %s36
    %s37 = sphi 0, %s34
    %s38 = sphi 0, %s37
    %s54 = sphi 0, %s38
    %s60 = sphi 0, %s62
    %s63 = sphi 0, %s60
    %s64 = sphi 0, %s63
    %s80 = sphi 0, %s64
    %s86 = sphi 0, %s88
    %s89 = sphi 0, %s86
    %s90 = sphi 0, %s89
    %s106 = sphi 0, %s90
    %s112 = sphi 0, %s114
    %s115 = sphi 0, %s112
    %s116 = sphi 0, %s115
    %s132 = sphi 0, %s116
    %s138 = sphi 0, %s140
    %s141 = sphi 0, %s138
    %s142 = sphi 0, %s141
    %s158 = sphi 0, %s142
  $region4: #{downsampling_forward.3} parent=0 // loop_header_branch
    %13 = sbr.rel (%p11) target = $region8
  $region5: #{downsampling_forward.3} parent=0 // loop_body
    %s15 = ssub.s32 %s10, 1
    %s16 = ssub.s32 %s10, 2
    %s23 = sadd.s32 1, %s18
    %p24 = scmp.ge.s32.totalorder %s23, 2
    %s25 = scalar_select %p24, 0, %s23
    %s26 = sadd.s32 1, %s17
    %s27 = scalar_select %p24, %s26, %s17
    %p28 = scmp.ge.s32.totalorder %s27, 1
    %s29 = scalar_select %p28, 0, %s27
    %s30 = ssub.s32 %s18, %s25
    %s31 = ssub.s32 %s17, %s29
    %s32 = sor.u32 %s30, %s31
    %p33 = scmp.eq.s32.totalorder %s32, 0
    %s35 = sadd.s32 %s34, 1
    %s36 = scalar_select %p33, %s34, %s35
    %p39 = pneg %p33
    %p40 = scmp.eq.s32.totalorder %s10, 1
    %p41 = por %p39, %p40
    %p42 = scmp.ne.s32.totalorder %s34, %s37
    %p43 = scmp.eq.s32.totalorder %s10, 0
    %p44 = por %p42, %p43
    %p45 = scmp.ne.s32.totalorder %s34, %s37
    %p46 = scmp.eq.s32.totalorder %s15, 1
    %p47 = por %p45, %p46
    %p48 = scmp.ne.s32.totalorder %s37, %s38
    %p49 = scmp.eq.s32.totalorder %s15, 0
    %p50 = por %p48, %p49
    %p51 = scmp.ne.s32.totalorder %s37, %s38
    %p52 = scmp.eq.s32.totalorder %s16, 1
    %p53 = por %p51, %p52
    %p55 = scmp.ne.s32.totalorder %s38, %s54
    %p56 = scmp.eq.s32.totalorder %s16, 0
    %p57 = por %p55, %p56
    %s58 = ssub.s32 %s18, %s25
    %p59 = scmp.eq.s32.totalorder %s58, 0
    %s61 = sadd.s32 %s60, 1
    %s62 = scalar_select %p59, %s60, %s61
    %p65 = pneg %p59
    %p66 = scmp.eq.s32.totalorder %s10, 1
    %p67 = por %p65, %p66
    %p68 = scmp.ne.s32.totalorder %s60, %s63
    %p69 = scmp.eq.s32.totalorder %s10, 0
    %p70 = por %p68, %p69
    %p71 = scmp.ne.s32.totalorder %s60, %s63
    %p72 = scmp.eq.s32.totalorder %s15, 1
    %p73 = por %p71, %p72
    %p74 = scmp.ne.s32.totalorder %s63, %s64
    %p75 = scmp.eq.s32.totalorder %s15, 0
    %p76 = por %p74, %p75
    %p77 = scmp.ne.s32.totalorder %s63, %s64
    %p78 = scmp.eq.s32.totalorder %s16, 1
    %p79 = por %p77, %p78
    %p81 = scmp.ne.s32.totalorder %s64, %s80
    %p82 = scmp.eq.s32.totalorder %s16, 0
    %p83 = por %p81, %p82
    %s84 = ssub.s32 %s18, %s25
    %p85 = scmp.eq.s32.totalorder %s84, 0
    %s87 = sadd.s32 %s86, 1
    %s88 = scalar_select %p85, %s86, %s87
    %p91 = pneg %p85
    %p92 = scmp.eq.s32.totalorder %s10, 1
    %p93 = por %p91, %p92
    %p94 = scmp.ne.s32.totalorder %s86, %s89
    %p95 = scmp.eq.s32.totalorder %s10, 0
    %p96 = por %p94, %p95
    %p97 = scmp.ne.s32.totalorder %s86, %s89
    %p98 = scmp.eq.s32.totalorder %s15, 1
    %p99 = por %p97, %p98
    %p100 = scmp.ne.s32.totalorder %s89, %s90
    %p101 = scmp.eq.s32.totalorder %s15, 0
    %p102 = por %p100, %p101
    %p103 = scmp.ne.s32.totalorder %s89, %s90
    %p104 = scmp.eq.s32.totalorder %s16, 1
    %p105 = por %p103, %p104
    %p107 = scmp.ne.s32.totalorder %s90, %s106
    %p108 = scmp.eq.s32.totalorder %s16, 0
    %p109 = por %p107, %p108
    %s110 = ssub.s32 %s18, %s25
    %p111 = scmp.eq.s32.totalorder %s110, 0
    %s113 = sadd.s32 %s112, 1
    %s114 = scalar_select %p111, %s112, %s113
    %p117 = pneg %p111
    %p118 = scmp.eq.s32.totalorder %s10, 1
    %p119 = por %p117, %p118
    %p120 = scmp.ne.s32.totalorder %s112, %s115
    %p121 = scmp.eq.s32.totalorder %s10, 0
    %p122 = por %p120, %p121
    %p123 = scmp.ne.s32.totalorder %s112, %s115
    %p124 = scmp.eq.s32.totalorder %s15, 1
    %p125 = por %p123, %p124
    %p126 = scmp.ne.s32.totalorder %s115, %s116
    %p127 = scmp.eq.s32.totalorder %s15, 0
    %p128 = por %p126, %p127
    %p129 = scmp.ne.s32.totalorder %s115, %s116
    %p130 = scmp.eq.s32.totalorder %s16, 1
    %p131 = por %p129, %p130
    %p133 = scmp.ne.s32.totalorder %s116, %s132
    %p134 = scmp.eq.s32.totalorder %s16, 0
    %p135 = por %p133, %p134
    %s136 = ssub.s32 %s17, %s29
    %p137 = scmp.eq.s32.totalorder %s136, 0
    %s139 = sadd.s32 %s138, 1
    %s140 = scalar_select %p137, %s138, %s139
    %p143 = pneg %p137
    %p144 = scmp.eq.s32.totalorder %s10, 1
    %p145 = por %p143, %p144
    %p146 = scmp.ne.s32.totalorder %s138, %s141
    %p147 = scmp.eq.s32.totalorder %s10, 0
    %p148 = por %p146, %p147
    %p149 = scmp.ne.s32.totalorder %s138, %s141
    %p150 = scmp.eq.s32.totalorder %s15, 1
    %p151 = por %p149, %p150
    %p152 = scmp.ne.s32.totalorder %s141, %s142
    %p153 = scmp.eq.s32.totalorder %s15, 0
    %p154 = por %p152, %p153
    %p155 = scmp.ne.s32.totalorder %s141, %s142
    %p156 = scmp.eq.s32.totalorder %s16, 1
    %p157 = por %p155, %p156
    %p159 = scmp.ne.s32.totalorder %s142, %s158
    %p160 = scmp.eq.s32.totalorder %s16, 0
    %p161 = por %p159, %p160
    %p162 = scmp.le.s32.totalorder 1, %s10
    %p163 = scmp.lt.s32.totalorder %s10, 3
    %p164 = pnand %p162, %p163
    %p165 = pneg %p164
    // Predicated region
    $region9: #{downsampling_forward.3} parent=5 // pred_check
      _
    $region10: #{downsampling_forward.3} parent=5 // pred_check_branch
      %167 = sbr.rel (%p164) target = $region12
    $region11: #{downsampling_forward.3} parent=5 // pred_region
      %s168 = ssub.s32 %s10, 1
    $region12: #{downsampling_forward.3} parent=5 // pred_fallthru
      _
    %p169 = scmp.lt.s32.totalorder %s10, 2
    // Predicated region
    $region13: #{downsampling_forward.3} parent=5 // pred_check
      %p170 = pneg %p169
    $region14: #{downsampling_forward.3} parent=5 // pred_check_branch
      %172 = sbr.rel (%p170) target = $region16
    $region15: #{downsampling_forward.3} parent=5 // pred_region
      // Predicated region
      $region17: #{downsampling_forward.3} parent=15 // pred_check
        %p173 = pneg %p44
      $region18: #{downsampling_forward.3} parent=15 // pred_check_branch
        %175 = sbr.rel (%p173) target = $region20
      $region19: #{downsampling_forward.3} parent=15 // pred_region
        %s176 = smul.u32 4, %s17
        %p177 = scmp.lt.s32.totalorder %s18, 1
        %s178 = scalar_select %p177, %s18, 1
        %p179 = scmp.lt.s32.totalorder %s176, 3
        %s180 = scalar_select %p179, %s176, 3
        %s181 = smul.addr %s178, 4
        %s182 = sadd.s32 %s180, %s181
        %s183 = smul.addr %s182, 8
        %s184 = scalar_lea.vmem %s0, %s183
        %s185 = smul.u32 4, %s17
      $region20: #{downsampling_forward.3} parent=15 // pred_fallthru
        _
      // Predicated region
      $region21: #{downsampling_forward.3} parent=15 // pred_check
        %p186 = pneg %p70
      $region22: #{downsampling_forward.3} parent=15 // pred_check_branch
        %188 = sbr.rel (%p186) target = $region24
      $region23: #{downsampling_forward.3} parent=15 // pred_region
        %p189 = scmp.lt.s32.totalorder %s18, 1
        %s190 = scalar_select %p189, %s18, 1
        %s191 = smul.addr %s190, 5
        %s192 = smul.addr %s191, 8
        %s193 = scalar_lea.vmem %s1, %s192
      $region24: #{downsampling_forward.3} parent=15 // pred_fallthru
        _
      // Predicated region
      $region25: #{downsampling_forward.3} parent=15 // pred_check
        %p194 = pneg %p96
      $region26: #{downsampling_forward.3} parent=15 // pred_check_branch
        %196 = sbr.rel (%p194) target = $region28
      $region27: #{downsampling_forward.3} parent=15 // pred_region
        %p197 = scmp.lt.s32.totalorder %s18, 1
        %s198 = scalar_select %p197, %s18, 1
        %s199 = scalar_lea.vmem %s2, %s198
      $region28: #{downsampling_forward.3} parent=15 // pred_fallthru
        _
      // Predicated region
      $region29: #{downsampling_forward.3} parent=15 // pred_check
        %p200 = pneg %p122
      $region30: #{downsampling_forward.3} parent=15 // pred_check_branch
        %202 = sbr.rel (%p200) target = $region32
      $region31: #{downsampling_forward.3} parent=15 // pred_region
        %p203 = scmp.lt.s32.totalorder %s18, 1
        %s204 = scalar_select %p203, %s18, 1
        %s205 = smul.addr %s204, 4
        %s206 = smul.addr %s205, 8
        %s207 = scalar_lea.vmem %s3, %s206
      $region32: #{downsampling_forward.3} parent=15 // pred_fallthru
        _
    $region16: #{downsampling_forward.3} parent=5 // pred_fallthru
      _
    %p208 = scmp.le.s32.totalorder 1, %s10
    %p209 = scmp.lt.s32.totalorder %s10, 3
    %p210 = pnand %p208, %p209
    %p211 = pneg %p210
    // Predicated region
    $region33: #{downsampling_forward.3} parent=5 // pred_check
      _
    $region34: #{downsampling_forward.3} parent=5 // pred_check_branch
      %213 = sbr.rel (%p210) target = $region36
    $region35: #{downsampling_forward.3} parent=5 // pred_region
      %s214 = ssub.s32 %s10, 1
      %s215 = smul.u32 4, %s19
      %p216 = scmp.lt.s32.totalorder %s20, 1
      %s217 = scalar_select %p216, %s20, 1
      %p218 = scmp.lt.s32.totalorder %s215, 3
      %s219 = scalar_select %p218, %s215, 3
      %s220 = smul.addr %s217, 4
      %s221 = sadd.s32 %s219, %s220
      %s222 = smul.addr %s221, 8
      %s223 = scalar_lea.vmem %s0, %s222
      %p224 = pneg %p50
      %p225 = pneg %p47
      %p226 = scmp.lt.s32.totalorder %s20, 1
      %s227 = scalar_select %p226, %s20, 1
      %s228 = smul.addr %s227, 5
      %s229 = smul.addr %s228, 8
      %s230 = scalar_lea.vmem %s1, %s229
      %p231 = pneg %p76
      %p232 = pneg %p73
      %p233 = scmp.lt.s32.totalorder %s20, 1
      %s234 = scalar_select %p233, %s20, 1
      %s235 = scalar_lea.vmem %s2, %s234
      %p236 = pneg %p102
      %p237 = pneg %p99
      %p238 = scmp.lt.s32.totalorder %s20, 1
      %s239 = scalar_select %p238, %s20, 1
      %s240 = smul.addr %s239, 4
      %s241 = smul.addr %s240, 8
      %s242 = scalar_lea.vmem %s3, %s241
      %p243 = pneg %p128
      %p244 = pneg %p125
      %p245 = pneg %p154
      %p246 = pneg %p151
      %s247 = smul.u32 4, %s19
      %p248 = scmp.lt.s32.totalorder %s247, 3
      %s249 = scalar_select %p248, %s247, 3
      %s250 = smul.addr %s249, 8
      %s251 = scalar_lea.vmem %s4, %s250
      %s252 = smul.u32 4, %s19
      %p253 = scmp.lt.s32.totalorder %s20, 1
      %s254 = scalar_select %p253, %s20, 1
      %p255 = scmp.lt.s32.totalorder %s252, 3
      %s256 = scalar_select %p255, %s252, 3
      %s257 = smul.addr %s254, 4
      %s258 = sadd.s32 %s256, %s257
      %s259 = smul.addr %s258, 8
      %s260 = scalar_lea.vmem %s0, %s259
      %s261 = smul.u32 4, %s19
      %p262 = scmp.lt.s32.totalorder %s20, 1
      %s263 = scalar_select %p262, %s20, 1
      %s264 = smul.addr %s263, 5
      %s265 = smul.addr %s264, 8
      %s266 = scalar_lea.vmem %s1, %s265
      %p267 = scmp.lt.s32.totalorder %s20, 1
      %s268 = scalar_select %p267, %s20, 1
      %s269 = scalar_lea.vmem %s2, %s268
      %p270 = scmp.lt.s32.totalorder %s20, 1
      %s271 = scalar_select %p270, %s20, 1
      %s272 = smul.addr %s271, 4
      %s273 = smul.addr %s272, 8
      %s274 = scalar_lea.vmem %s3, %s273
      %s275 = smul.u32 4, %s19
      %p276 = scmp.lt.s32.totalorder %s275, 3
      %s277 = scalar_select %p276, %s275, 3
      %s278 = smul.addr %s277, 8
      %s279 = scalar_lea.vmem %s4, %s278
      %s280 = smul.u32 4, %s19
      %p281 = scmp.eq.s32.totalorder %s20, 0
      // Predicated region
      $region37: #{downsampling_forward.3} parent=35 // pred_check
        %p282 = pneg %p281
      $region38: #{downsampling_forward.3} parent=35 // pred_check_branch
        %284 = sbr.rel (%p282) target = $region40
      $region39: #{downsampling_forward.3} parent=35 // pred_region
        %vm285 = vcmask 261120
        %286 = vst.msk [vmem:[%s279] sm:$0xff] %vm285, 0.0
        %287 = vst.msk [vmem:[%s279 + $0x8] sm:$0xff] %vm285, 0.0
        %288 = vst.msk [vmem:[%s279 + $0x10] sm:$0xff] %vm285, 0.0
        %289 = vst.msk [vmem:[%s279 + $0x18] sm:$0xff] %vm285, 0.0
      $region40: #{downsampling_forward.3} parent=35 // pred_fallthru
        _
      %v290 = vld [vmem:[%s260] sm:$0xff]
      %v291 = vld [vmem:[%s260 + $0x8] sm:$0xff]
      %v292 = vld [vmem:[%s260 + $0x10] sm:$0xff]
      %v293 = vld [vmem:[%s260 + $0x18] sm:$0xff]
      %v294 = vld [vmem:[%s266] sm:$0xff]
      %v295 = vld [vmem:[%s266 + $0x8] sm:$0xff]
      %v296 = vld [vmem:[%s266 + $0x10] sm:$0xff]
      %v297 = vld [vmem:[%s266 + $0x18] sm:$0xff]
      %v298 = vld [vmem:[%s266 + $0x20] sm:$0xf]
      %v299 = vld [vmem:[%s269] sm:$0x1]
      %v301 = vlaneseq
      %v302 = vshrl.u32 %v301, 7
      %v303 = vsub.s32 0, %v302
      %v304 = vrot.slane %v299, %v303
      %vm306 = vcmask 293888
      %v308 = vsel %vm306, %v290, 0
      %v311 = vsel %vm306, %v291, 0
      %v314 = vsel %vm306, %v292, 0
      %v317 = vsel %vm306, %v293, 0
      %vm319 = vcmask 1043456
      %v321 = vsel %vm319, %v298, 0
      %323 = vmatprep.subr.mxu0 0.0
      %324 = vmatpush1.msra.mxu0 %v294
      %325 = vmatprep.subr.mxu0 0.0
      %326 = vmatpush1.msra.mxu0 %v295
      %327 = vmatprep.subr.mxu0 0.0
      %328 = vmatpush1.msra.mxu0 %v296
      %329 = vmatprep.subr.mxu0 0.0
      %330 = vmatpush1.msra.mxu0 %v297
      %331 = vmatprep.subr.mxu0 0.0
      %332 = vmatpush1.msra.mxu0 %v321
      %333 = vmatprep.subr.mxu0 0.0
      %334 = vmatpush1.msra.mxu0 0.0
      %335 = vmatprep.subr.mxu0 0.0
      %336 = vmatpush1.msra.mxu0 0.0
      %337 = vmatprep.subr.mxu0 0.0
      %338 = vmatpush1.msra.mxu0 0.0
      %339 = vmatprep.subr.mxu0 0.0
      %340 = vmatpush1.msra.mxu0 0.0
      %341 = vmatprep.subr.mxu0 0.0
      %342 = vmatpush1.msra.mxu0 0.0
      %343 = vmatprep.subr.mxu0 0.0
      %344 = vmatpush1.msra.mxu0 0.0
      %345 = vmatprep.subr.mxu0 0.0
      %346 = vmatpush1.msra.mxu0 0.0
      %347 = vmatprep.subr.mxu0 0.0
      %348 = vmatpush1.msra.mxu0 0.0
      %349 = vmatprep.subr.mxu0 0.0
      %350 = vmatpush1.msra.mxu0 0.0
      %351 = vmatprep.subr.mxu0 0.0
      %352 = vmatpush1.msra.mxu0 0.0
      %353 = vmatprep.subr.mxu0 0.0
      %354 = vmatpush1.msra.mxu0 0.0
      %355 = vmatprep.subr.mxu0 0.0
      %356 = vmatpush1.msra.mxu0 0.0
      %357 = vmatprep.subr.mxu0 0.0
      %358 = vmatpush1.msra.mxu0 0.0
      %359 = vmatprep.subr.mxu0 0.0
      %360 = vmatpush1.msra.mxu0 0.0
      %361 = vmatprep.subr.mxu0 0.0
      %362 = vmatpush1.msra.mxu0 0.0
      %363 = vmatprep.subr.mxu0 0.0
      %364 = vmatpush1.msra.mxu0 0.0
      %365 = vmatprep.subr.mxu0 0.0
      %366 = vmatpush1.msra.mxu0 0.0
      %367 = vmatprep.subr.mxu0 0.0
      %368 = vmatpush1.msra.mxu0 0.0
      %369 = vmatprep.subr.mxu0 0.0
      %370 = vmatpush1.msra.mxu0 0.0
      %371 = vmatprep.subr.mxu0 0.0
      %372 = vmatpush1.msra.mxu0 0.0
      %373 = vmatprep.subr.mxu0 0.0
      %374 = vmatpush1.msra.mxu0 0.0
      %375 = vmatprep.subr.mxu0 0.0
      %376 = vmatpush1.msra.mxu0 0.0
      %377 = vmatprep.subr.mxu0 0.0
      %378 = vmatpush1.msra.mxu0 0.0
      %379 = vmatprep.subr.mxu0 0.0
      %380 = vmatpush1.msra.mxu0 0.0
      %381 = vmatprep.subr.mxu0 0.0
      %382 = vmatpush1.msra.mxu0 0.0
      %383 = vmatprep.subr.mxu0 0.0
      %384 = vmatpush1.msra.mxu0 0.0
      %385 = vmatprep.subr.mxu0 0.0
      %386 = vmatpush1.msra.mxu0 0.0
      %387 = vmatprep.mubr.f32.mxu0 0.0
      %388 = vmatmul.mubr.f32.gmra.mrb[0].mxu0 %v308
      %v389 = vpop.f32.mrb[0].mxu0
      %v390 = vadd.f32 %v304, %v389
      %v391 = vpop.f32.mrb[0].mxu0
      %392 = vmatprep.mubr.f32.mxu0 0.0
      %393 = vmatmul.mubr.f32.gmra.mrb[0].mxu0 %v311
      %v394 = vpop.f32.mrb[0].mxu0
      %v395 = vadd.f32 %v304, %v394
      %v396 = vpop.f32.mrb[0].mxu0
      %397 = vmatprep.mubr.f32.mxu0 0.0
      %398 = vmatmul.mubr.f32.gmra.mrb[0].mxu0 %v314
      %v399 = vpop.f32.mrb[0].mxu0
      %v400 = vadd.f32 %v304, %v399
      %v401 = vpop.f32.mrb[0].mxu0
      %402 = vmatprep.mubr.f32.mxu0 0.0
      %403 = vmatmul.mubr.f32.gmra.mrb[0].mxu0 %v317
      %v404 = vpop.f32.mrb[0].mxu0
      %v405 = vadd.f32 %v304, %v404
      %v406 = vpop.f32.mrb[0].mxu0
      %407 = vdwg.mxu0
      %v408 = vmul.f32 %v390, 0.5
      %v409 = vmul.f32 %v395, 0.5
      %v410 = vmul.f32 %v400, 0.5
      %v411 = vmul.f32 %v405, 0.5
      %v412 = vmul.f32 %v390, 0.044715
      %v413 = vmul.f32 %v395, 0.044715
      %v414 = vmul.f32 %v400, 0.044715
      %v415 = vmul.f32 %v405, 0.044715
      %v416 = vmul.f32 %v412, %v390
      %v417 = vmul.f32 %v413, %v395
      %v418 = vmul.f32 %v414, %v400
      %v419 = vmul.f32 %v415, %v405
      %v420 = vmul.f32 %v416, %v390
      %v421 = vmul.f32 %v417, %v395
      %v422 = vmul.f32 %v418, %v400
      %v423 = vmul.f32 %v419, %v405
      %v424 = vadd.f32 %v390, %v420
      %v425 = vadd.f32 %v395, %v421
      %v426 = vadd.f32 %v400, %v422
      %v427 = vadd.f32 %v405, %v423
      %v428 = vmul.f32 %v424, 0.7978846
      %v429 = vmul.f32 %v425, 0.7978846
      %v430 = vmul.f32 %v426, 0.7978846
      %v431 = vmul.f32 %v427, 0.7978846
      %v432 = vtanh.pop %v428
      %v433 = vtanh.pop %v429
      %v434 = vtanh.pop %v430
      %v435 = vtanh.pop %v431
      %v436 = vadd.f32 %v432, 1.0
      %v437 = vadd.f32 %v433, 1.0
      %v438 = vadd.f32 %v434, 1.0
      %v439 = vadd.f32 %v435, 1.0
      %v440 = vmul.f32 %v408, %v436
      %v441 = vmul.f32 %v409, %v437
      %v442 = vmul.f32 %v410, %v438
      %v443 = vmul.f32 %v411, %v439
      %v444 = vld [vmem:[%s279] sm:$0xff]
      %v445 = vld [vmem:[%s279 + $0x8] sm:$0xff]
      %v446 = vld [vmem:[%s279 + $0x10] sm:$0xff]
      %v447 = vld [vmem:[%s279 + $0x18] sm:$0xff]
      %v448 = vld [vmem:[%s274] sm:$0xff]
      %v449 = vld [vmem:[%s274 + $0x8] sm:$0xff]
      %v450 = vld [vmem:[%s274 + $0x10] sm:$0xff]
      %v451 = vld [vmem:[%s274 + $0x18] sm:$0xff]
      %vm452 = vcmask 261120
      %v454 = vsel %vm452, %v440, 0
      %v457 = vsel %vm452, %v441, 0
      %v460 = vsel %vm452, %v442, 0
      %v463 = vsel %vm452, %v443, 0
      %465 = vmatprep.subr.mxu0 0.0
      %466 = vmatpush1.msra.mxu0 %v448
      %467 = vmatprep.subr.mxu0 0.0
      %468 = vmatpush1.msra.mxu0 %v449
      %469 = vmatprep.subr.mxu0 0.0
      %470 = vmatpush1.msra.mxu0 %v450
      %471 = vmatprep.subr.mxu0 0.0
      %472 = vmatpush1.msra.mxu0 %v451
      %473 = vmatprep.subr.mxu0 0.0
      %474 = vmatpush1.msra.mxu0 0.0
      %475 = vmatprep.subr.mxu0 0.0
      %476 = vmatpush1.msra.mxu0 0.0
      %477 = vmatprep.subr.mxu0 0.0
      %478 = vmatpush1.msra.mxu0 0.0
      %479 = vmatprep.subr.mxu0 0.0
      %480 = vmatpush1.msra.mxu0 0.0
      %481 = vmatprep.subr.mxu0 0.0
      %482 = vmatpush1.msra.mxu0 0.0
      %483 = vmatprep.subr.mxu0 0.0
      %484 = vmatpush1.msra.mxu0 0.0
      %485 = vmatprep.subr.mxu0 0.0
      %486 = vmatpush1.msra.mxu0 0.0
      %487 = vmatprep.subr.mxu0 0.0
      %488 = vmatpush1.msra.mxu0 0.0
      %489 = vmatprep.subr.mxu0 0.0
      %490 = vmatpush1.msra.mxu0 0.0
      %491 = vmatprep.subr.mxu0 0.0
      %492 = vmatpush1.msra.mxu0 0.0
      %493 = vmatprep.subr.mxu0 0.0
      %494 = vmatpush1.msra.mxu0 0.0
      %495 = vmatprep.subr.mxu0 0.0
      %496 = vmatpush1.msra.mxu0 0.0
      %497 = vmatprep.subr.mxu0 0.0
      %498 = vmatpush1.msra.mxu0 0.0
      %499 = vmatprep.subr.mxu0 0.0
      %500 = vmatpush1.msra.mxu0 0.0
      %501 = vmatprep.subr.mxu0 0.0
      %502 = vmatpush1.msra.mxu0 0.0
      %503 = vmatprep.subr.mxu0 0.0
      %504 = vmatpush1.msra.mxu0 0.0
      %505 = vmatprep.subr.mxu0 0.0
      %506 = vmatpush1.msra.mxu0 0.0
      %507 = vmatprep.subr.mxu0 0.0
      %508 = vmatpush1.msra.mxu0 0.0
      %509 = vmatprep.subr.mxu0 0.0
      %510 = vmatpush1.msra.mxu0 0.0
      %511 = vmatprep.subr.mxu0 0.0
      %512 = vmatpush1.msra.mxu0 0.0
      %513 = vmatprep.subr.mxu0 0.0
      %514 = vmatpush1.msra.mxu0 0.0
      %515 = vmatprep.subr.mxu0 0.0
      %516 = vmatpush1.msra.mxu0 0.0
      %517 = vmatprep.subr.mxu0 0.0
      %518 = vmatpush1.msra.mxu0 0.0
      %519 = vmatprep.subr.mxu0 0.0
      %520 = vmatpush1.msra.mxu0 0.0
      %521 = vmatprep.subr.mxu0 0.0
      %522 = vmatpush1.msra.mxu0 0.0
      %523 = vmatprep.subr.mxu0 0.0
      %524 = vmatpush1.msra.mxu0 0.0
      %525 = vmatprep.subr.mxu0 0.0
      %526 = vmatpush1.msra.mxu0 0.0
      %527 = vmatprep.subr.mxu0 0.0
      %528 = vmatpush1.msra.mxu0 0.0
      %529 = vmatprep.mubr.f32.mxu0 0.0
      %530 = vmatmul.mubr.f32.gmra.mrb[0].mxu0 %v454
      %v531 = vpop.f32.mrb[0].mxu0
      %v532 = vadd.f32 0.0, %v531
      %v533 = vpop.f32.mrb[0].mxu0
      %534 = vmatprep.mubr.f32.mxu0 0.0
      %535 = vmatmul.mubr.f32.gmra.mrb[0].mxu0 %v457
      %v536 = vpop.f32.mrb[0].mxu0
      %v537 = vadd.f32 0.0, %v536
      %v538 = vpop.f32.mrb[0].mxu0
      %539 = vmatprep.mubr.f32.mxu0 0.0
      %540 = vmatmul.mubr.f32.gmra.mrb[0].mxu0 %v460
      %v541 = vpop.f32.mrb[0].mxu0
      %v542 = vadd.f32 0.0, %v541
      %v543 = vpop.f32.mrb[0].mxu0
      %544 = vmatprep.mubr.f32.mxu0 0.0
      %545 = vmatmul.mubr.f32.gmra.mrb[0].mxu0 %v463
      %v546 = vpop.f32.mrb[0].mxu0
      %v547 = vadd.f32 0.0, %v546
      %v548 = vpop.f32.mrb[0].mxu0
      %549 = vdwg.mxu0
      %v550 = vadd.f32 %v444, %v532
      %v551 = vadd.f32 %v445, %v537
      %v552 = vadd.f32 %v446, %v542
      %v553 = vadd.f32 %v447, %v547
      %554 = vst.msk [vmem:[%s279] sm:$0xff] %vm452, %v550
      %555 = vst.msk [vmem:[%s279 + $0x8] sm:$0xff] %vm452, %v551
      %556 = vst.msk [vmem:[%s279 + $0x10] sm:$0xff] %vm452, %v552
      %557 = vst.msk [vmem:[%s279 + $0x18] sm:$0xff] %vm452, %v553
      %s558 = smul.u32 4, %s19
      %p559 = scmp.lt.s32.totalorder %s558, 3
      %s560 = scalar_select %p559, %s558, 3
      %s561 = smul.addr %s560, 8
      %s562 = scalar_lea.vmem %s4, %s561
      // Predicated region
      $region41: #{downsampling_forward.3} parent=35 // pred_check
        %p563 = pneg %p151
      $region42: #{downsampling_forward.3} parent=35 // pred_check_branch
        %565 = sbr.rel (%p563) target = $region44
      $region43: #{downsampling_forward.3} parent=35 // pred_region
        %s566 = smul.u32 4, %s19
      $region44: #{downsampling_forward.3} parent=35 // pred_fallthru
        _
      // Predicated region
      $region45: #{downsampling_forward.3} parent=35 // pred_check
        %p567 = pneg %p151
      $region46: #{downsampling_forward.3} parent=35 // pred_check_branch
        %569 = sbr.rel (%p567) target = $region48
      $region47: #{downsampling_forward.3} parent=35 // pred_region
        %s570 = smul.u32 4, %s19
        %p571 = scmp.lt.s32.totalorder %s570, 3
        %s572 = scalar_select %p571, %s570, 3
        %s573 = smul.addr %s572, 8
        %s574 = scalar_lea.vmem %s4, %s573
      $region48: #{downsampling_forward.3} parent=35 // pred_fallthru
        _
    $region36: #{downsampling_forward.3} parent=5 // pred_fallthru
      _
    %p575 = scmp.le.s32.totalorder 2, %s10
    // Predicated region
    $region49: #{downsampling_forward.3} parent=5 // pred_check
      %p576 = pneg %p575
    $region50: #{downsampling_forward.3} parent=5 // pred_check_branch
      %578 = sbr.rel (%p576) target = $region52
    $region51: #{downsampling_forward.3} parent=5 // pred_region
      %s579 = ssub.s32 %s10, 2
    $region52: #{downsampling_forward.3} parent=5 // pred_fallthru
      _
  $region6: #{downsampling_forward.3} parent=0 // loop_footer
    %s14 = sadd.s32 1, %s10
  $region7: #{downsampling_forward.3} parent=0 // loop_footer_branch
    %9 = sbr.rel target = $region3
  $region8: #{downsampling_forward.3} parent=0 // loop_exit
    _

// kernel: downsampling_forward.5
$region0: #{downsampling_forward.5}
  #allocation0 [shape = 'u32[]', space=smem, size = 0x4, offset = 0x4, fixed_abs, tag = 'smem constant byte address 0x4 - core index']
  #allocation1 [shape = 'u32[144,128]{1,0:T(1,128)}', space=vmem, size = 0x12000, scoped, tag = 'internal scratch']
  %s0 = inlined_call_operand.vmem [shape: f32[32,288], index: 0, kind: input, shape index: {}]
  %s1 = inlined_call_operand.vmem [shape: f32[288,32], index: 1, kind: input, shape index: {}]
  %s2 = inlined_call_operand.vmem [shape: f32[1,32], index: 2, kind: input, shape index: {}]
  %s3 = inlined_call_operand.vmem [shape: f32[1,32], index: 3, kind: input, shape index: {}]
  %s4 = inlined_call_operand.vmem [shape: f32[1,32], index: 4, kind: input, shape index: {}]
  %s5 = inlined_call_operand.vmem [shape: f32[32,32], index: 5, kind: input, shape index: {}]
  %s6 = inlined_call_operand.vmem [shape: f32[1,32], index: 6, kind: input, shape index: {}]
  %s7 = inlined_call_operand.vmem [shape: f32[1,32], index: 7, kind: input, shape index: {}]
  %s8 = inlined_call_operand.hbm [shape: f32[32,32], index: 8, kind: output, shape index: {}]
  %s9 = sld [smem:[#allocation0]]
  $region42: #{downsampling_forward.5} parent=0
    _
  %s11 = ssub.s32 1, %s9
  %s12 = scalar_select 0, %s11, %s9
  $region1: #{downsampling_forward.5} parent=0
    #allocation2 [shape = 'u8[16384]{0}', space=vmem, size = 0x4000, scoped, tag = 'output window, operand 0, single buffered']
    #allocation3 [shape = 's32[1]{0}', space=sflag, size = 0x4, scoped, tag = 'scoped memory for downsampling_forward.5']
    %13 = vsyncpa [#allocation3], 0
    // Predicated region
    $region2: #{downsampling_forward.5} parent=1 // pred_check
      _
    $region3: #{downsampling_forward.5} parent=1 // pred_check_branch
      %15 = sbr.rel (0) target = $region5
    $region4: #{downsampling_forward.5} parent=1 // pred_region
      _
    $region5: #{downsampling_forward.5} parent=1 // pred_fallthru
      _
    // Predicated region
    $region6: #{downsampling_forward.5} parent=1 // pred_check
      _
    $region7: #{downsampling_forward.5} parent=1 // pred_check_branch
      %17 = sbr.rel (0) target = $region9
    $region8: #{downsampling_forward.5} parent=1 // pred_region
      _
    $region9: #{downsampling_forward.5} parent=1 // pred_fallthru
      _
    // Predicated region
    $region10: #{downsampling_forward.5} parent=1 // pred_check
      _
    $region11: #{downsampling_forward.5} parent=1 // pred_check_branch
      %19 = sbr.rel (0) target = $region13
    $region12: #{downsampling_forward.5} parent=1 // pred_region
      _
    $region13: #{downsampling_forward.5} parent=1 // pred_fallthru
      _
    // Predicated region
    $region14: #{downsampling_forward.5} parent=1 // pred_check
      _
    $region15: #{downsampling_forward.5} parent=1 // pred_check_branch
      %21 = sbr.rel (0) target = $region17
    $region16: #{downsampling_forward.5} parent=1 // pred_region
      _
    $region17: #{downsampling_forward.5} parent=1 // pred_fallthru
      _
    // Predicated region
    $region18: #{downsampling_forward.5} parent=1 // pred_check
      _
    $region19: #{downsampling_forward.5} parent=1 // pred_check_branch
      %23 = sbr.rel (0) target = $region21
    $region20: #{downsampling_forward.5} parent=1 // pred_region
      _
    $region21: #{downsampling_forward.5} parent=1 // pred_fallthru
      _
    // Predicated region
    $region22: #{downsampling_forward.5} parent=1 // pred_check
      _
    $region23: #{downsampling_forward.5} parent=1 // pred_check_branch
      %25 = sbr.rel (0) target = $region25
    $region24: #{downsampling_forward.5} parent=1 // pred_region
      _
    $region25: #{downsampling_forward.5} parent=1 // pred_fallthru
      _
    // Predicated region
    $region26: #{downsampling_forward.5} parent=1 // pred_check
      _
    $region27: #{downsampling_forward.5} parent=1 // pred_check_branch
      %27 = sbr.rel (0) target = $region29
    $region28: #{downsampling_forward.5} parent=1 // pred_region
      _
    $region29: #{downsampling_forward.5} parent=1 // pred_fallthru
      _
    // Predicated region
    $region30: #{downsampling_forward.5} parent=1 // pred_check
      _
    $region31: #{downsampling_forward.5} parent=1 // pred_check_branch
      %29 = sbr.rel (0) target = $region33
    $region32: #{downsampling_forward.5} parent=1 // pred_region
      _
    $region33: #{downsampling_forward.5} parent=1 // pred_fallthru
      _
    %v30 = vld [vmem:[%s0] sm:$0xff]
    %v31 = vld [vmem:[%s0 + $0x8] sm:$0xff]
    %v32 = vld [vmem:[%s0 + $0x10] sm:$0xff]
    %v33 = vld [vmem:[%s0 + $0x18] sm:$0xff]
    %v34 = vld [vmem:[%s0 + $0x20] sm:$0xff]
    %v35 = vld [vmem:[%s0 + $0x28] sm:$0xff]
    %v36 = vld [vmem:[%s0 + $0x30] sm:$0xff]
    %v37 = vld [vmem:[%s0 + $0x38] sm:$0xff]
    %v38 = vld [vmem:[%s0 + $0x40] sm:$0xff]
    %v39 = vld [vmem:[%s0 + $0x48] sm:$0xff]
    %v40 = vld [vmem:[%s0 + $0x50] sm:$0xff]
    %v41 = vld [vmem:[%s0 + $0x58] sm:$0xff]
    %v42 = vld [vmem:[%s1] sm:$0xff]
    %v43 = vld [vmem:[%s1 + $0x8] sm:$0xff]
    %v44 = vld [vmem:[%s1 + $0x10] sm:$0xff]
    %v45 = vld [vmem:[%s1 + $0x18] sm:$0xff]
    %v46 = vld [vmem:[%s1 + $0x20] sm:$0xff]
    %v47 = vld [vmem:[%s1 + $0x28] sm:$0xff]
    %v48 = vld [vmem:[%s1 + $0x30] sm:$0xff]
    %v49 = vld [vmem:[%s1 + $0x38] sm:$0xff]
    %v50 = vld [vmem:[%s1 + $0x40] sm:$0xff]
    %v51 = vld [vmem:[%s1 + $0x48] sm:$0xff]
    %v52 = vld [vmem:[%s1 + $0x50] sm:$0xff]
    %v53 = vld [vmem:[%s1 + $0x58] sm:$0xff]
    %v54 = vld [vmem:[%s1 + $0x60] sm:$0xff]
    %v55 = vld [vmem:[%s1 + $0x68] sm:$0xff]
    %v56 = vld [vmem:[%s1 + $0x70] sm:$0xff]
    %v57 = vld [vmem:[%s1 + $0x78] sm:$0xff]
    %v58 = vld [vmem:[%s1 + $0x80] sm:$0xff]
    %v59 = vld [vmem:[%s1 + $0x88] sm:$0xff]
    %v60 = vld [vmem:[%s1 + $0x90] sm:$0xff]
    %v61 = vld [vmem:[%s1 + $0x98] sm:$0xff]
    %v62 = vld [vmem:[%s1 + $0xa0] sm:$0xff]
    %v63 = vld [vmem:[%s1 + $0xa8] sm:$0xff]
    %v64 = vld [vmem:[%s1 + $0xb0] sm:$0xff]
    %v65 = vld [vmem:[%s1 + $0xb8] sm:$0xff]
    %v66 = vld [vmem:[%s1 + $0xc0] sm:$0xff]
    %v67 = vld [vmem:[%s1 + $0xc8] sm:$0xff]
    %v68 = vld [vmem:[%s1 + $0xd0] sm:$0xff]
    %v69 = vld [vmem:[%s1 + $0xd8] sm:$0xff]
    %v70 = vld [vmem:[%s1 + $0xe0] sm:$0xff]
    %v71 = vld [vmem:[%s1 + $0xe8] sm:$0xff]
    %v72 = vld [vmem:[%s1 + $0xf0] sm:$0xff]
    %v73 = vld [vmem:[%s1 + $0xf8] sm:$0xff]
    %v74 = vld [vmem:[%s1 + $0x100] sm:$0xff]
    %v75 = vld [vmem:[%s1 + $0x108] sm:$0xff]
    %v76 = vld [vmem:[%s1 + $0x110] sm:$0xff]
    %v77 = vld [vmem:[%s1 + $0x118] sm:$0xff]
    %v78 = vld [vmem:[%s2] sm:$0x1]
    %v80 = vlaneseq
    %v81 = vshrl.u32 %v80, 7
    %v82 = vsub.s32 0, %v81
    %v83 = vrot.slane %v78, %v82
    %vm85 = vcmask 261120
    %v87 = vsel %vm85, %v32, 0
    %v90 = vsel %vm85, %v35, 0
    %v93 = vsel %vm85, %v38, 0
    %v96 = vsel %vm85, %v41, 0
    %98 = vmatprep.subr.mxu0 0.0
    %99 = vmatpush1.msra.mxu0 %v42
    %100 = vmatprep.subr.mxu0 0.0
    %101 = vmatpush1.msra.mxu0 %v43
    %102 = vmatprep.subr.mxu0 0.0
    %103 = vmatpush1.msra.mxu0 %v44
    %104 = vmatprep.subr.mxu0 0.0
    %105 = vmatpush1.msra.mxu0 %v45
    %106 = vmatprep.subr.mxu0 0.0
    %107 = vmatpush1.msra.mxu0 %v46
    %108 = vmatprep.subr.mxu0 0.0
    %109 = vmatpush1.msra.mxu0 %v47
    %110 = vmatprep.subr.mxu0 0.0
    %111 = vmatpush1.msra.mxu0 %v48
    %112 = vmatprep.subr.mxu0 0.0
    %113 = vmatpush1.msra.mxu0 %v49
    %114 = vmatprep.subr.mxu0 0.0
    %115 = vmatpush1.msra.mxu0 %v50
    %116 = vmatprep.subr.mxu0 0.0
    %117 = vmatpush1.msra.mxu0 %v51
    %118 = vmatprep.subr.mxu0 0.0
    %119 = vmatpush1.msra.mxu0 %v52
    %120 = vmatprep.subr.mxu0 0.0
    %121 = vmatpush1.msra.mxu0 %v53
    %122 = vmatprep.subr.mxu0 0.0
    %123 = vmatpush1.msra.mxu0 %v54
    %124 = vmatprep.subr.mxu0 0.0
    %125 = vmatpush1.msra.mxu0 %v55
    %126 = vmatprep.subr.mxu0 0.0
    %127 = vmatpush1.msra.mxu0 %v56
    %128 = vmatprep.subr.mxu0 0.0
    %129 = vmatpush1.msra.mxu0 %v57
    %130 = vmatprep.subr.mxu0 0.0
    %131 = vmatpush1.msra.mxu0 %v58
    %132 = vmatprep.subr.mxu0 0.0
    %133 = vmatpush1.msra.mxu0 %v59
    %134 = vmatprep.subr.mxu0 0.0
    %135 = vmatpush1.msra.mxu0 %v60
    %136 = vmatprep.subr.mxu0 0.0
    %137 = vmatpush1.msra.mxu0 %v61
    %138 = vmatprep.subr.mxu0 0.0
    %139 = vmatpush1.msra.mxu0 %v62
    %140 = vmatprep.subr.mxu0 0.0
    %141 = vmatpush1.msra.mxu0 %v63
    %142 = vmatprep.subr.mxu0 0.0
    %143 = vmatpush1.msra.mxu0 %v64
    %144 = vmatprep.subr.mxu0 0.0
    %145 = vmatpush1.msra.mxu0 %v65
    %146 = vmatprep.subr.mxu0 0.0
    %147 = vmatpush1.msra.mxu0 %v66
    %148 = vmatprep.subr.mxu0 0.0
    %149 = vmatpush1.msra.mxu0 %v67
    %150 = vmatprep.subr.mxu0 0.0
    %151 = vmatpush1.msra.mxu0 %v68
    %152 = vmatprep.subr.mxu0 0.0
    %153 = vmatpush1.msra.mxu0 %v69
    %154 = vmatprep.subr.mxu0 0.0
    %155 = vmatpush1.msra.mxu0 %v70
    %156 = vmatprep.subr.mxu0 0.0
    %157 = vmatpush1.msra.mxu0 %v71
    %158 = vmatprep.subr.mxu0 0.0
    %159 = vmatpush1.msra.mxu0 %v72
    %160 = vmatprep.subr.mxu0 0.0
    %161 = vmatpush1.msra.mxu0 %v73
    %162 = vmatprep.mubr.f32.mxu0 %v31
    %163 = vmatmul.mubr.f32.gmra.mrb[0].mxu0 %v30
    %v164 = vpop.f32.mrb[0].mxu0
    %v165 = vadd.f32 %v83, %v164
    %v166 = vpop.f32.mrb[0].mxu0
    %167 = vmatprep.mubr.f32.mxu0 %v34
    %168 = vmatmul.mubr.f32.gmra.mrb[0].mxu0 %v33
    %v169 = vpop.f32.mrb[0].mxu0
    %v170 = vadd.f32 %v83, %v169
    %v171 = vpop.f32.mrb[0].mxu0
    %172 = vmatprep.mubr.f32.mxu0 %v37
    %173 = vmatmul.mubr.f32.gmra.mrb[0].mxu0 %v36
    %v174 = vpop.f32.mrb[0].mxu0
    %v175 = vadd.f32 %v83, %v174
    %v176 = vpop.f32.mrb[0].mxu0
    %177 = vmatprep.mubr.f32.mxu0 %v40
    %178 = vmatmul.mubr.f32.gmra.mrb[0].mxu0 %v39
    %v179 = vpop.f32.mrb[0].mxu0
    %v180 = vadd.f32 %v83, %v179
    %v181 = vpop.f32.mrb[0].mxu0
    %182 = vdwg.mxu0
    %183 = vmatprep.subr.mxu0 0.0
    %184 = vmatpush1.msra.mxu0 %v74
    %185 = vmatprep.subr.mxu0 0.0
    %186 = vmatpush1.msra.mxu0 %v75
    %187 = vmatprep.subr.mxu0 0.0
    %188 = vmatpush1.msra.mxu0 %v76
    %189 = vmatprep.subr.mxu0 0.0
    %190 = vmatpush1.msra.mxu0 %v77
    %191 = vmatprep.subr.mxu0 0.0
    %192 = vmatpush1.msra.mxu0 0.0
    %193 = vmatprep.subr.mxu0 0.0
    %194 = vmatpush1.msra.mxu0 0.0
    %195 = vmatprep.subr.mxu0 0.0
    %196 = vmatpush1.msra.mxu0 0.0
    %197 = vmatprep.subr.mxu0 0.0
    %198 = vmatpush1.msra.mxu0 0.0
    %199 = vmatprep.subr.mxu0 0.0
    %200 = vmatpush1.msra.mxu0 0.0
    %201 = vmatprep.subr.mxu0 0.0
    %202 = vmatpush1.msra.mxu0 0.0
    %203 = vmatprep.subr.mxu0 0.0
    %204 = vmatpush1.msra.mxu0 0.0
    %205 = vmatprep.subr.mxu0 0.0
    %206 = vmatpush1.msra.mxu0 0.0
    %207 = vmatprep.subr.mxu0 0.0
    %208 = vmatpush1.msra.mxu0 0.0
    %209 = vmatprep.subr.mxu0 0.0
    %210 = vmatpush1.msra.mxu0 0.0
    %211 = vmatprep.subr.mxu0 0.0
    %212 = vmatpush1.msra.mxu0 0.0
    %213 = vmatprep.subr.mxu0 0.0
    %214 = vmatpush1.msra.mxu0 0.0
    %215 = vmatprep.subr.mxu0 0.0
    %216 = vmatpush1.msra.mxu0 0.0
    %217 = vmatprep.subr.mxu0 0.0
    %218 = vmatpush1.msra.mxu0 0.0
    %219 = vmatprep.subr.mxu0 0.0
    %220 = vmatpush1.msra.mxu0 0.0
    %221 = vmatprep.subr.mxu0 0.0
    %222 = vmatpush1.msra.mxu0 0.0
    %223 = vmatprep.subr.mxu0 0.0
    %224 = vmatpush1.msra.mxu0 0.0
    %225 = vmatprep.subr.mxu0 0.0
    %226 = vmatpush1.msra.mxu0 0.0
    %227 = vmatprep.subr.mxu0 0.0
    %228 = vmatpush1.msra.mxu0 0.0
    %229 = vmatprep.subr.mxu0 0.0
    %230 = vmatpush1.msra.mxu0 0.0
    %231 = vmatprep.subr.mxu0 0.0
    %232 = vmatpush1.msra.mxu0 0.0
    %233 = vmatprep.subr.mxu0 0.0
    %234 = vmatpush1.msra.mxu0 0.0
    %235 = vmatprep.subr.mxu0 0.0
    %236 = vmatpush1.msra.mxu0 0.0
    %237 = vmatprep.subr.mxu0 0.0
    %238 = vmatpush1.msra.mxu0 0.0
    %239 = vmatprep.subr.mxu0 0.0
    %240 = vmatpush1.msra.mxu0 0.0
    %241 = vmatprep.subr.mxu0 0.0
    %242 = vmatpush1.msra.mxu0 0.0
    %243 = vmatprep.subr.mxu0 0.0
    %244 = vmatpush1.msra.mxu0 0.0
    %245 = vmatprep.subr.mxu0 0.0
    %246 = vmatpush1.msra.mxu0 0.0
    %247 = vmatprep.mubr.f32.mxu0 0.0
    %248 = vmatmul.mubr.f32.gmra.mrb[0].mxu0 %v87
    %v249 = vpop.f32.mrb[0].mxu0
    %v250 = vadd.f32 %v165, %v249
    %v251 = vpop.f32.mrb[0].mxu0
    %252 = vmatprep.mubr.f32.mxu0 0.0
    %253 = vmatmul.mubr.f32.gmra.mrb[0].mxu0 %v90
    %v254 = vpop.f32.mrb[0].mxu0
    %v255 = vadd.f32 %v170, %v254
    %v256 = vpop.f32.mrb[0].mxu0
    %257 = vmatprep.mubr.f32.mxu0 0.0
    %258 = vmatmul.mubr.f32.gmra.mrb[0].mxu0 %v93
    %v259 = vpop.f32.mrb[0].mxu0
    %v260 = vadd.f32 %v175, %v259
    %v261 = vpop.f32.mrb[0].mxu0
    %262 = vmatprep.mubr.f32.mxu0 0.0
    %263 = vmatmul.mubr.f32.gmra.mrb[0].mxu0 %v96
    %v264 = vpop.f32.mrb[0].mxu0
    %v265 = vadd.f32 %v180, %v264
    %v266 = vpop.f32.mrb[0].mxu0
    %267 = vdwg.mxu0
    %v268 = vld [vmem:[%s3] sm:$0x1]
    %v270 = vlaneseq
    %v271 = vshrl.u32 %v270, 7
    %v272 = vsub.s32 0, %v271
    %v273 = vrot.slane %v268, %v272
    %v275 = vmul.f32 %v250, %v273
    %v276 = vmul.f32 %v255, %v273
    %v277 = vmul.f32 %v260, %v273
    %v278 = vmul.f32 %v265, %v273
    %v279 = vld [vmem:[%s4] sm:$0x1]
    %v281 = vlaneseq
    %v282 = vshrl.u32 %v281, 7
    %v283 = vsub.s32 0, %v282
    %v284 = vrot.slane %v279, %v283
    %v286 = vadd.f32 %v275, %v284
    %v287 = vadd.f32 %v276, %v284
    %v288 = vadd.f32 %v277, %v284
    %v289 = vadd.f32 %v278, %v284
    %v290 = vsub.f32 0.0, %v286
    %v291 = vsub.f32 0.0, %v287
    %v292 = vsub.f32 0.0, %v288
    %v293 = vsub.f32 0.0, %v289
    %v294 = vmul.f32 %v290, 1.442695
    %v295 = vpow.pop %v294
    %v296 = vmul.f32 %v291, 1.442695
    %v297 = vpow.pop %v296
    %v298 = vmul.f32 %v292, 1.442695
    %v299 = vpow.pop %v298
    %v300 = vmul.f32 %v293, 1.442695
    %v301 = vpow.pop %v300
    %v302 = vadd.f32 %v295, 1.0
    %v303 = vadd.f32 %v297, 1.0
    %v304 = vadd.f32 %v299, 1.0
    %v305 = vadd.f32 %v301, 1.0
    %v306 = vrcp.pop %v302
    %v307 = vmul.f32 1.0, %v306
    %v308 = vrcp.pop %v303
    %v309 = vmul.f32 1.0, %v308
    %v310 = vrcp.pop %v304
    %v311 = vmul.f32 1.0, %v310
    %v312 = vrcp.pop %v305
    %v313 = vmul.f32 1.0, %v312
    %v314 = vmul.f32 %v286, %v307
    %v315 = vmul.f32 %v287, %v309
    %v316 = vmul.f32 %v288, %v311
    %v317 = vmul.f32 %v289, %v313
    %v318 = vld [vmem:[%s5] sm:$0xff]
    %v319 = vld [vmem:[%s5 + $0x8] sm:$0xff]
    %v320 = vld [vmem:[%s5 + $0x10] sm:$0xff]
    %v321 = vld [vmem:[%s5 + $0x18] sm:$0xff]
    %v322 = vld [vmem:[%s6] sm:$0x1]
    %v324 = vlaneseq
    %v325 = vshrl.u32 %v324, 7
    %v326 = vsub.s32 0, %v325
    %v327 = vrot.slane %v322, %v326
    %v329 = vmul.f32 %v318, %v327
    %v330 = vmul.f32 %v319, %v327
    %v331 = vmul.f32 %v320, %v327
    %v332 = vmul.f32 %v321, %v327
    %v333 = vld [vmem:[%s7] sm:$0x1]
    %v335 = vlaneseq
    %v336 = vshrl.u32 %v335, 7
    %v337 = vsub.s32 0, %v336
    %v338 = vrot.slane %v333, %v337
    %v340 = vmul.f32 %v314, %v338
    %v341 = vmul.f32 %v315, %v338
    %v342 = vmul.f32 %v316, %v338
    %v343 = vmul.f32 %v317, %v338
    %v344 = vadd.f32 %v329, %v340
    %v345 = vadd.f32 %v330, %v341
    %v346 = vadd.f32 %v331, %v342
    %v347 = vadd.f32 %v332, %v343
    %348 = vst.msk [vmem:[#allocation2] sm:$0xff] %vm85, %v344
    %349 = vst.msk [vmem:[#allocation2 + $0x8] sm:$0xff] %vm85, %v345
    %350 = vst.msk [vmem:[#allocation2 + $0x10] sm:$0xff] %vm85, %v346
    %351 = vst.msk [vmem:[#allocation2 + $0x18] sm:$0xff] %vm85, %v347
    // Predicated region
    $region34: #{downsampling_forward.5} parent=1 // pred_check
      _
    $region35: #{downsampling_forward.5} parent=1 // pred_check_branch
      %353 = sbr.rel (0) target = $region37
    $region36: #{downsampling_forward.5} parent=1 // pred_region
      %s355 = ssub.s32 512, 512
      %356 = vsyncadd [#allocation3], %s355
      %s357 = sshll.u32 [#allocation2], 4
      %s358 = int_to_ptr.vmem [resolvable:$true] %s357
      %363 = dma.vmem_to_hbm [thread:$0]  %s358, 512, %s8, [#allocation3], 128, 128, 8
    $region37: #{downsampling_forward.5} parent=1 // pred_fallthru
      _
    // Predicated region
    $region38: #{downsampling_forward.5} parent=1 // pred_check
      _
    $region39: #{downsampling_forward.5} parent=1 // pred_check_branch
      %365 = sbr.rel (0) target = $region41
    $region40: #{downsampling_forward.5} parent=1 // pred_region
      %366 = dma.done [#allocation3], 512
    $region41: #{downsampling_forward.5} parent=1 // pred_fallthru
      _
    %367 = vsyncpa [#allocation3], 1

</llo_original>
